<compile_context>
chip_gen: v7x
topology: tpu7x:2x2x1
jax: 0.10.0
libtpu: 0.0.40
codegen_flags: <defaults>
</compile_context>

<pallas_src>
import functools

import numpy as np

import jax
import jax.numpy as jnp
from jax.experimental import pallas as pl
from jax.experimental.pallas import tpu as pltpu


def _layernorm(x, g, b, eps=1e-5):
    mu = jnp.mean(x, axis=-1, keepdims=True)
    xc = x - mu
    var = jnp.mean(xc * xc, axis=-1, keepdims=True)
    return xc * jax.lax.rsqrt(var + eps) * g + b


def _fused_encoder_kernel(x_ref,
                          wqkv_ref, bqkv_ref, wo_ref, bo_ref,
                          ln1g_ref, ln1b_ref, w1_ref, b1_ref,
                          w2_ref, b2_ref, ln2g_ref, ln2b_ref,
                          lng_ref, lnb_ref, wffn_ref, bffn_ref,
                          o_ref, h_ref, *, B, S):
    """One grid step == one TransformerEncoderLayer over the whole (B*S) batch.

    The f32 activation is carried across layer steps in the VMEM scratch h_ref.
    The final LayerNorm + ffn Linear are fused into the last layer step.
    """
    l = pl.program_id(0)
    BS, D = h_ref.shape

    # Load the input activation into the resident scratch on the first layer.
    @pl.when(l == 0)
    def _():
        h_ref[...] = x_ref[...].astype(jnp.float32)

    x = h_ref[...]                                   # (BS, D) f32
    xb = x.astype(jnp.bfloat16)

    # ---- fused single-head self-attention (nhead == 1) ----
    # Fused QKV projection: bf16 operands, f32 accumulation.  The 1/sqrt(D) score
    # scale is already folded into the Q columns of wqkv / bqkv (param prep).
    qkv = jnp.dot(xb, wqkv_ref[0],
                  preferred_element_type=jnp.float32) + bqkv_ref[0]   # (BS, 3D) f32

    q = qkv[:, 0 * D:1 * D].reshape(B, S, D).astype(jnp.bfloat16)
    k = qkv[:, 1 * D:2 * D].reshape(B, S, D).astype(jnp.bfloat16)
    v = qkv[:, 2 * D:3 * D].reshape(B, S, D).astype(jnp.bfloat16)

    # Per-batch-element scores: no cross-batch redundancy, no mask needed.
    s = jnp.einsum("bqd,bkd->bqk", q, k,
                   preferred_element_type=jnp.float32)                # (B, S, S) f32
    m = jnp.max(s, axis=-1, keepdims=True)
    e = jnp.exp(s - m)
    p = e * pl.reciprocal(jnp.sum(e, axis=-1, keepdims=True), approx=True)
    a = jnp.einsum("bqk,bkd->bqd", p.astype(jnp.bfloat16), v,
                   preferred_element_type=jnp.float32).reshape(BS, D)

    attn = jnp.dot(a.astype(jnp.bfloat16), wo_ref[0],
                   preferred_element_type=jnp.float32) + bo_ref[0]

    # residual + LayerNorm1 (f32)
    h = _layernorm(x + attn, ln1g_ref[0], ln1b_ref[0])

    # feed-forward (relu), bf16 MXU inputs, f32 accumulation
    f = jnp.maximum(
        jnp.dot(h.astype(jnp.bfloat16), w1_ref[0],
                preferred_element_type=jnp.float32) + b1_ref[0], 0.0)
    f2 = jnp.dot(f.astype(jnp.bfloat16), w2_ref[0],
                 preferred_element_type=jnp.float32) + b2_ref[0]

    # residual + LayerNorm2 (carried to the next layer step)
    y = _layernorm(h + f2, ln2g_ref[0], ln2b_ref[0])
    h_ref[...] = y

    # Final LayerNorm of the TransformerEncoder + ffn Linear, fused into last step.
    @pl.when(l == pl.num_programs(0) - 1)
    def _():
        z = _layernorm(y, lng_ref[...], lnb_ref[...])
        out = jnp.dot(z.astype(jnp.bfloat16), wffn_ref[...],
                      preferred_element_type=jnp.float32) + bffn_ref[...]
        o_ref[...] = out.astype(o_ref.dtype)


def _stacked_spec(arr):
    """Per-layer streamed weight: block = one layer slice, indexed by grid axis."""
    nt = arr.ndim - 1
    return pl.BlockSpec((1,) + tuple(arr.shape[1:]),
                        lambda l, nt=nt: (l,) + (0,) * nt)


def _full_spec(arr):
    zeros = (0,) * arr.ndim
    return pl.BlockSpec(tuple(arr.shape), lambda l, zeros=zeros: zeros)


def _fused_encoder_call(x2, p, B, S):
    BS, D = x2.shape
    L = p["wqkv"].shape[0]
    F = p["w1"].shape[2]
    O = p["wffn"].shape[1]

    in_arrays = [x2,
                 p["wqkv"], p["bqkv"], p["wo"], p["bo"],
                 p["ln1g"], p["ln1b"], p["w1"], p["b1"],
                 p["w2"], p["b2"], p["ln2g"], p["ln2b"],
                 p["lng"], p["lnb"], p["wffn"], p["bffn"]]

    stacked_names = ("wqkv", "bqkv", "wo", "bo", "ln1g", "ln1b",
                     "w1", "b1", "w2", "b2", "ln2g", "ln2b")
    in_specs = [_full_spec(x2)]
    in_specs += [_stacked_spec(p[n]) for n in stacked_names]
    in_specs += [_full_spec(p[n]) for n in ("lng", "lnb", "wffn", "bffn")]

    # ---- rough cost model for XLA scheduling ----
    per_layer_flops = (2 * BS * D * (3 * D)        # qkv projection
                       + 2 * 2 * B * S * S * D     # scores + p@v
                       + 2 * BS * D * D            # out projection
                       + 2 * 2 * BS * D * F)       # FFN
    flops = L * per_layer_flops + 2 * BS * D * O
    transcendentals = L * (B * S * S + 3 * BS) + BS
    bytes_accessed = int(sum(int(a.size) * a.dtype.itemsize for a in in_arrays)
                         + BS * O * 4)

    # ---- VMEM budget: 2x-buffered per-layer weights + resident activation + IO ----
    per_layer_w_bytes = sum(int(np.prod(p[n].shape[1:])) * p[n].dtype.itemsize
                            for n in stacked_names)
    resident_bytes = (2 * BS * D * 4            # scratch + input block
                      + 2 * BS * O * 4          # output block (double-buffered)
                      + sum(int(p[n].size) * p[n].dtype.itemsize
                            for n in ("lng", "lnb", "wffn", "bffn")))
    vmem_limit = int(min(max(2 * per_layer_w_bytes + resident_bytes + (4 << 20),
                             16 << 20),
                         64 << 20))

    kernel = functools.partial(_fused_encoder_kernel, B=B, S=S)
    return pl.pallas_call(
        kernel,
        out_shape=jax.ShapeDtypeStruct((BS, O), jnp.float32),
        grid=(L,),
        in_specs=in_specs,
        out_specs=pl.BlockSpec((BS, O), lambda l: (0, 0)),
        scratch_shapes=[pltpu.VMEM((BS, D), jnp.float32)],
        compiler_params=pltpu.CompilerParams(
            dimension_semantics=("arbitrary",),
            vmem_limit_bytes=vmem_limit),
        cost_estimate=pl.CostEstimate(flops=flops,
                                      transcendentals=transcendentals,
                                      bytes_accessed=bytes_accessed),
    )(*in_arrays)


@jax.jit
def encoder_forward(x_sbd, kernel_params):
    """x_sbd: (S, B, D) — PyTorch TransformerEncoder convention (batch_first=False)."""
    S, B, D = x_sbd.shape
    O = kernel_params["wffn"].shape[1]
    x_bsd = jnp.transpose(x_sbd, (1, 0, 2))            # (B, S, D) batched-attn layout
    x2 = x_bsd.reshape(B * S, D)
    out2 = _fused_encoder_call(x2, kernel_params, B, S)   # (B*S, O)
    return jnp.transpose(out2.reshape(B, S, O), (1, 0, 2))


# ---------------- one-time parameter transform for the kernel ----------------
def prepare_kernel_params(p):
    """Fold 1/sqrt(D) into Q columns of wqkv/bqkv and cast matmul weights to bf16."""
    D = p["wqkv"].shape[1]
    scale = 1.0 / np.sqrt(D)
    kp = dict(p)
    kp["wqkv"] = p["wqkv"].at[:, :, :D].multiply(scale).astype(jnp.bfloat16)
    kp["bqkv"] = p["bqkv"].at[:, :, :D].multiply(scale)      # bias stays f32
    for name in ("wo", "w1", "w2", "wffn"):
        kp[name] = p[name].astype(jnp.bfloat16)
    return kp


# ---------------- pure-JAX reference (independent batched formulation) ----------------
def _bdot(a, w):
    """bf16-operand matmul with f32 accumulation (matches the kernel's MXU config)."""
    return jnp.dot(a.astype(jnp.bfloat16), w.astype(jnp.bfloat16),
                   preferred_element_type=jnp.float32)


def _ref_forward(x_sbd, params):
    x = jnp.transpose(x_sbd, (1, 0, 2)).astype(jnp.float32)   # (B, S, D)
    D = x.shape[-1]
    L = params["wqkv"].shape[0]
    for l in range(L):
        qkv = _bdot(x, params["wqkv"][l]) + params["bqkv"][l]
        q, k, v = qkv[..., :D], qkv[..., D:2 * D], qkv[..., 2 * D:]
        s = jnp.einsum("bqd,bkd->bqk",
                       q.astype(jnp.bfloat16), k.astype(jnp.bfloat16),
                       preferred_element_type=jnp.float32) / (D ** 0.5)
        a = jax.nn.softmax(s, axis=-1)
        ctx = jnp.einsum("bqk,bkd->bqd",
                         a.astype(jnp.bfloat16), v.astype(jnp.bfloat16),
                         preferred_element_type=jnp.float32)
        attn = _bdot(ctx, params["wo"][l]) + params["bo"][l]
        h = _layernorm(x + attn, params["ln1g"][l], params["ln1b"][l])
        f = jax.nn.relu(_bdot(h, params["w1"][l]) + params["b1"][l])
        f2 = _bdot(f, params["w2"][l]) + params["b2"][l]
        x = _layernorm(h + f2, params["ln2g"][l], params["ln2b"][l])
    y = _bdot(_layernorm(x, params["lng"], params["lnb"]),
              params["wffn"]) + params["bffn"]
    return jnp.transpose(y, (1, 0, 2))


# ---------------- deterministic parameter init (stacked per-layer weights) ----------------
def init_params(key, input_size, output_size, dim_feedforward, num_layers):
    D, F, O, L = input_size, dim_feedforward, output_size, num_layers

    def w(k, shape, scale=0.05):
        return scale * jax.random.normal(k, shape, jnp.float32)

    ks = jax.random.split(key, 7)
    return dict(
        wqkv=w(ks[0], (L, D, 3 * D)),
        bqkv=w(ks[1], (L, 1, 3 * D)),
        wo=w(ks[2], (L, D, D)),
        bo=jnp.zeros((L, 1, D), jnp.float32),
        ln1g=jnp.ones((L, 1, D), jnp.float32),
        ln1b=jnp.zeros((L, 1, D), jnp.float32),
        w1=w(ks[3], (L, D, F)),
        b1=jnp.zeros((L, 1, F), jnp.float32),
        w2=w(ks[4], (L, F, D)),
        b2=jnp.zeros((L, 1, D), jnp.float32),
        ln2g=jnp.ones((L, 1, D), jnp.float32),
        ln2b=jnp.zeros((L, 1, D), jnp.float32),
        lng=jnp.ones((1, D), jnp.float32),
        lnb=jnp.zeros((1, D), jnp.float32),
        wffn=w(ks[5], (D, O)),
        bffn=w(ks[6], (1, O)),
    )


if __name__ == "__main__":
    # Small shapes consistent with the module: input_size=32, output_size=16,
    # nhead=1 (default), num_layers=2, dim_feedforward=64.
    S, B, D, O, F, L = 8, 2, 32, 16, 64, 2

    key = jax.random.PRNGKey(0)
    kx, kp = jax.random.split(key)
    x = jax.random.normal(kx, (S, B, D), jnp.float32)    # (seq, batch, feature)
    params = init_params(kp, input_size=D, output_size=O,
                         dim_feedforward=F, num_layers=L)
    kernel_params = prepare_kernel_params(params)         # one-time transform

    out = jax.block_until_ready(encoder_forward(x, kernel_params))
    assert out.shape == (S, B, O), out.shape

    ref = jax.block_until_ready(_ref_forward(x, params))
    err = float(jnp.max(jnp.abs(out - ref)))
    # bf16 matmul operands + approx-reciprocal softmax => ~1e-3-level deviation.
    assert jnp.allclose(out, ref, rtol=1e-2, atol=1e-2), err

    print("KERNEL_OK")
</pallas_src>

<mosaic_0001>
module attributes {stable_mosaic.version = 11 : i64} {
  func.func @_fused_encoder_kernel(%arg0: i32, %arg1: memref<16x32xf32, #tpu.memory_space<vmem>>, %arg2: memref<1x32x96xbf16, #tpu.memory_space<vmem>>, %arg3: memref<1x1x96xf32, #tpu.memory_space<vmem>>, %arg4: memref<1x32x32xbf16, #tpu.memory_space<vmem>>, %arg5: memref<1x1x32xf32, #tpu.memory_space<vmem>>, %arg6: memref<1x1x32xf32, #tpu.memory_space<vmem>>, %arg7: memref<1x1x32xf32, #tpu.memory_space<vmem>>, %arg8: memref<1x32x64xbf16, #tpu.memory_space<vmem>>, %arg9: memref<1x1x64xf32, #tpu.memory_space<vmem>>, %arg10: memref<1x64x32xbf16, #tpu.memory_space<vmem>>, %arg11: memref<1x1x32xf32, #tpu.memory_space<vmem>>, %arg12: memref<1x1x32xf32, #tpu.memory_space<vmem>>, %arg13: memref<1x1x32xf32, #tpu.memory_space<vmem>>, %arg14: memref<1x32xf32, #tpu.memory_space<vmem>>, %arg15: memref<1x32xf32, #tpu.memory_space<vmem>>, %arg16: memref<32x16xbf16, #tpu.memory_space<vmem>>, %arg17: memref<1x16xf32, #tpu.memory_space<vmem>>, %arg18: memref<16x16xf32, #tpu.memory_space<vmem>>, %arg19: memref<16x32xf32, #tpu.memory_space<vmem>>) attributes {dimension_semantics = [#tpu.dimension_semantics<arbitrary>], iteration_bounds = array<i64: 2>, scalar_prefetch = 0 : i64, scratch_operands = 1 : i64, tpu.core_type = #tpu.core_type<tc>, window_params = [{pipeline_mode = #tpu.pipeline_mode<synchronous>, transform_indices = @transform_0, window_bounds = array<i64: 16, 32>}, {transform_indices = @transform_1, window_bounds = array<i64: 1, 32, 96>}, {transform_indices = @transform_2, window_bounds = array<i64: 1, 1, 96>}, {transform_indices = @transform_3, window_bounds = array<i64: 1, 32, 32>}, {transform_indices = @transform_4, window_bounds = array<i64: 1, 1, 32>}, {transform_indices = @transform_5, window_bounds = array<i64: 1, 1, 32>}, {transform_indices = @transform_6, window_bounds = array<i64: 1, 1, 32>}, {transform_indices = @transform_7, window_bounds = array<i64: 1, 32, 64>}, {transform_indices = @transform_8, window_bounds = array<i64: 1, 1, 64>}, {transform_indices = @transform_9, window_bounds = array<i64: 1, 64, 32>}, {transform_indices = @transform_10, window_bounds = array<i64: 1, 1, 32>}, {transform_indices = @transform_11, window_bounds = array<i64: 1, 1, 32>}, {transform_indices = @transform_12, window_bounds = array<i64: 1, 1, 32>}, {pipeline_mode = #tpu.pipeline_mode<synchronous>, transform_indices = @transform_13, window_bounds = array<i64: 1, 32>}, {pipeline_mode = #tpu.pipeline_mode<synchronous>, transform_indices = @transform_14, window_bounds = array<i64: 1, 32>}, {pipeline_mode = #tpu.pipeline_mode<synchronous>, transform_indices = @transform_15, window_bounds = array<i64: 32, 16>}, {pipeline_mode = #tpu.pipeline_mode<synchronous>, transform_indices = @transform_16, window_bounds = array<i64: 1, 16>}, {pipeline_mode = #tpu.pipeline_mode<synchronous>, transform_indices = @transform_17, window_bounds = array<i64: 16, 16>}]} {
    %c0_i32 = arith.constant 0 : i32
    %0 = arith.cmpi eq, %arg0, %c0_i32 : i32
    %1 = arith.extui %0 : i1 to i32
    %c0_i32_0 = arith.constant 0 : i32
    %2 = arith.cmpi ne, %1, %c0_i32_0 : i32
    scf.if %2 {
      %c0_59 = arith.constant 0 : index
      %c0_60 = arith.constant 0 : index
      %115 = vector.load %arg1[%c0_59, %c0_60] : memref<16x32xf32, #tpu.memory_space<vmem>>, vector<16x32xf32>
      %c0_61 = arith.constant 0 : index
      %c0_62 = arith.constant 0 : index
      %116 = vector.load %arg19[%c0_61, %c0_62] : memref<16x32xf32, #tpu.memory_space<vmem>>, vector<16x32xf32>
      tpu.vector_store %arg19[%c0_61, %c0_62], %115 {strides = array<i32>} : memref<16x32xf32, #tpu.memory_space<vmem>>, vector<16x32xf32>,
    } else {
    }
    %c0 = arith.constant 0 : index
    %c0_1 = arith.constant 0 : index
    %3 = vector.load %arg19[%c0, %c0_1] : memref<16x32xf32, #tpu.memory_space<vmem>>, vector<16x32xf32>
    %4 = arith.truncf %3 : vector<16x32xf32> to vector<16x32xbf16>
    %c0_2 = arith.constant 0 : index
    %c0_3 = arith.constant 0 : index
    %c0_4 = arith.constant 0 : index
    %5 = vector.load %arg2[%c0_2, %c0_3, %c0_4] : memref<1x32x96xbf16, #tpu.memory_space<vmem>>, vector<1x32x96xbf16>
    %6 = vector.shape_cast %5 : vector<1x32x96xbf16> to vector<32x96xbf16>
    %cst = arith.constant dense<0.000000e+00> : vector<16x96xf32>
    %7 = tpu.matmul %4, %6, %cst {dimension_numbers = #tpu.dot_dimension_numbers<[1], [0], [0], [1], [0, 0, 1, 1], [], []>} : vector<16x32xbf16>, vector<32x96xbf16>, vector<16x96xf32> -> vector<16x96xf32>
    %c0_5 = arith.constant 0 : index
    %c0_6 = arith.constant 0 : index
    %c0_7 = arith.constant 0 : index
    %8 = vector.load %arg3[%c0_5, %c0_6, %c0_7] : memref<1x1x96xf32, #tpu.memory_space<vmem>>, vector<1x1x96xf32>
    %9 = vector.shape_cast %8 : vector<1x1x96xf32> to vector<1x96xf32>
    %10 = vector.broadcast %9 : vector<1x96xf32> to vector<16x96xf32>
    %11 = arith.addf %7, %10 : vector<16x96xf32>
    %12 = vector.extract_strided_slice %11 {offsets = [0, 0], sizes = [16, 32], strides = [1, 1]} : vector<16x96xf32> to vector<16x32xf32>
    %13 = vector.shape_cast %12 : vector<16x32xf32> to vector<2x8x32xf32>
    %14 = arith.truncf %13 : vector<2x8x32xf32> to vector<2x8x32xbf16>
    %15 = vector.extract_strided_slice %11 {offsets = [0, 32], sizes = [16, 32], strides = [1, 1]} : vector<16x96xf32> to vector<16x32xf32>
    %16 = vector.shape_cast %15 : vector<16x32xf32> to vector<2x8x32xf32>
    %17 = arith.truncf %16 : vector<2x8x32xf32> to vector<2x8x32xbf16>
    %18 = vector.extract_strided_slice %11 {offsets = [0, 64], sizes = [16, 32], strides = [1, 1]} : vector<16x96xf32> to vector<16x32xf32>
    %19 = vector.shape_cast %18 : vector<16x32xf32> to vector<2x8x32xf32>
    %20 = arith.truncf %19 : vector<2x8x32xf32> to vector<2x8x32xbf16>
    "tpu.trace_start"() <{level = 10 : i32, message = "bqd,bkd->bqk"}> : () -> ()
    %cst_8 = arith.constant dense<0.000000e+00> : vector<2x8x8xf32>
    %21 = tpu.matmul %14, %17, %cst_8 {dimension_numbers = #tpu.dot_dimension_numbers<[2], [2], [1], [1], [0, 0, 0, 1, 1, 1], [0], [0]>} : vector<2x8x32xbf16>, vector<2x8x32xbf16>, vector<2x8x8xf32> -> vector<2x8x8xf32>
    "tpu.trace_stop"() : () -> ()
    %cst_9 = arith.constant dense<0xFF800000> : vector<2x8xf32>
    %22 = vector.multi_reduction <maximumf>, %21, %cst_9 [2] : vector<2x8x8xf32> to vector<2x8xf32>
    %23 = vector.shape_cast %22 : vector<2x8xf32> to vector<2x8x1xf32>
    %24 = vector.broadcast %23 : vector<2x8x1xf32> to vector<2x8x8xf32>
    %25 = arith.subf %21, %24 : vector<2x8x8xf32>
    %26 = math.exp %25 : vector<2x8x8xf32>
    %cst_10 = arith.constant dense<0.000000e+00> : vector<2x8xf32>
    %27 = vector.multi_reduction <add>, %26, %cst_10 [2] : vector<2x8x8xf32> to vector<2x8xf32>
    %28 = vector.shape_cast %27 : vector<2x8xf32> to vector<2x8x1xf32>
    %29 = tpu.reciprocal %28 {approx = true} : vector<2x8x1xf32> -> vector<2x8x1xf32>
    %30 = vector.broadcast %29 : vector<2x8x1xf32> to vector<2x8x8xf32>
    %31 = arith.mulf %26, %30 : vector<2x8x8xf32>
    %32 = arith.truncf %31 : vector<2x8x8xf32> to vector<2x8x8xbf16>
    "tpu.trace_start"() <{level = 10 : i32, message = "bqk,bkd->bqd"}> : () -> ()
    %cst_11 = arith.constant dense<0.000000e+00> : vector<2x8x32xf32>
    %33 = tpu.matmul %32, %20, %cst_11 {dimension_numbers = #tpu.dot_dimension_numbers<[2], [1], [1], [2], [0, 0, 0, 1, 1, 2], [0], [0]>} : vector<2x8x8xbf16>, vector<2x8x32xbf16>, vector<2x8x32xf32> -> vector<2x8x32xf32>
    "tpu.trace_stop"() : () -> ()
    %34 = vector.shape_cast %33 : vector<2x8x32xf32> to vector<16x32xf32>
    %35 = arith.truncf %34 : vector<16x32xf32> to vector<16x32xbf16>
    %c0_12 = arith.constant 0 : index
    %c0_13 = arith.constant 0 : index
    %c0_14 = arith.constant 0 : index
    %36 = vector.load %arg4[%c0_12, %c0_13, %c0_14] : memref<1x32x32xbf16, #tpu.memory_space<vmem>>, vector<1x32x32xbf16>
    %37 = vector.shape_cast %36 : vector<1x32x32xbf16> to vector<32x32xbf16>
    %cst_15 = arith.constant dense<0.000000e+00> : vector<16x32xf32>
    %38 = tpu.matmul %35, %37, %cst_15 {dimension_numbers = #tpu.dot_dimension_numbers<[1], [0], [0], [1], [0, 0, 1, 1], [], []>} : vector<16x32xbf16>, vector<32x32xbf16>, vector<16x32xf32> -> vector<16x32xf32>
    %c0_16 = arith.constant 0 : index
    %c0_17 = arith.constant 0 : index
    %c0_18 = arith.constant 0 : index
    %39 = vector.load %arg5[%c0_16, %c0_17, %c0_18] : memref<1x1x32xf32, #tpu.memory_space<vmem>>, vector<1x1x32xf32>
    %40 = vector.shape_cast %39 : vector<1x1x32xf32> to vector<1x32xf32>
    %41 = vector.broadcast %40 : vector<1x32xf32> to vector<16x32xf32>
    %42 = arith.addf %38, %41 : vector<16x32xf32>
    %43 = arith.addf %3, %42 : vector<16x32xf32>
    %c0_19 = arith.constant 0 : index
    %c0_20 = arith.constant 0 : index
    %c0_21 = arith.constant 0 : index
    %44 = vector.load %arg6[%c0_19, %c0_20, %c0_21] : memref<1x1x32xf32, #tpu.memory_space<vmem>>, vector<1x1x32xf32>
    %45 = vector.shape_cast %44 : vector<1x1x32xf32> to vector<1x32xf32>
    %c0_22 = arith.constant 0 : index
    %c0_23 = arith.constant 0 : index
    %c0_24 = arith.constant 0 : index
    %46 = vector.load %arg7[%c0_22, %c0_23, %c0_24] : memref<1x1x32xf32, #tpu.memory_space<vmem>>, vector<1x1x32xf32>
    %47 = vector.shape_cast %46 : vector<1x1x32xf32> to vector<1x32xf32>
    %cst_25 = arith.constant dense<0.000000e+00> : vector<16xf32>
    %48 = vector.multi_reduction <add>, %43, %cst_25 [1] : vector<16x32xf32> to vector<16xf32>
    %49 = vector.shape_cast %48 : vector<16xf32> to vector<16x1xf32>
    %cst_26 = arith.constant 3.200000e+01 : f32
    %50 = vector.broadcast %cst_26 : f32 to vector<16x1xf32>
    %51 = arith.divf %49, %50 : vector<16x1xf32>
    %52 = vector.broadcast %51 : vector<16x1xf32> to vector<16x32xf32>
    %53 = arith.subf %43, %52 : vector<16x32xf32>
    %54 = arith.mulf %53, %53 : vector<16x32xf32>
    %cst_27 = arith.constant dense<0.000000e+00> : vector<16xf32>
    %55 = vector.multi_reduction <add>, %54, %cst_27 [1] : vector<16x32xf32> to vector<16xf32>
    %56 = vector.shape_cast %55 : vector<16xf32> to vector<16x1xf32>
    %cst_28 = arith.constant 3.200000e+01 : f32
    %57 = vector.broadcast %cst_28 : f32 to vector<16x1xf32>
    %58 = arith.divf %56, %57 : vector<16x1xf32>
    %cst_29 = arith.constant 9.99999974E-6 : f32
    %59 = vector.broadcast %cst_29 : f32 to vector<16x1xf32>
    %60 = arith.addf %58, %59 : vector<16x1xf32>
    %61 = math.rsqrt %60 : vector<16x1xf32>
    %62 = vector.broadcast %61 : vector<16x1xf32> to vector<16x32xf32>
    %63 = arith.mulf %53, %62 : vector<16x32xf32>
    %64 = vector.broadcast %45 : vector<1x32xf32> to vector<16x32xf32>
    %65 = arith.mulf %63, %64 : vector<16x32xf32>
    %66 = vector.broadcast %47 : vector<1x32xf32> to vector<16x32xf32>
    %67 = arith.addf %65, %66 : vector<16x32xf32>
    %68 = arith.truncf %67 : vector<16x32xf32> to vector<16x32xbf16>
    %c0_30 = arith.constant 0 : index
    %c0_31 = arith.constant 0 : index
    %c0_32 = arith.constant 0 : index
    %69 = vector.load %arg8[%c0_30, %c0_31, %c0_32] : memref<1x32x64xbf16, #tpu.memory_space<vmem>>, vector<1x32x64xbf16>
    %70 = vector.shape_cast %69 : vector<1x32x64xbf16> to vector<32x64xbf16>
    %cst_33 = arith.constant dense<0.000000e+00> : vector<16x64xf32>
    %71 = tpu.matmul %68, %70, %cst_33 {dimension_numbers = #tpu.dot_dimension_numbers<[1], [0], [0], [1], [0, 0, 1, 1], [], []>} : vector<16x32xbf16>, vector<32x64xbf16>, vector<16x64xf32> -> vector<16x64xf32>
    %c0_34 = arith.constant 0 : index
    %c0_35 = arith.constant 0 : index
    %c0_36 = arith.constant 0 : index
    %72 = vector.load %arg9[%c0_34, %c0_35, %c0_36] : memref<1x1x64xf32, #tpu.memory_space<vmem>>, vector<1x1x64xf32>
    %73 = vector.shape_cast %72 : vector<1x1x64xf32> to vector<1x64xf32>
    %74 = vector.broadcast %73 : vector<1x64xf32> to vector<16x64xf32>
    %75 = arith.addf %71, %74 : vector<16x64xf32>
    %cst_37 = arith.constant 0.000000e+00 : f32
    %76 = vector.broadcast %cst_37 : f32 to vector<16x64xf32>
    %77 = arith.maximumf %75, %76 : vector<16x64xf32>
    %78 = arith.truncf %77 : vector<16x64xf32> to vector<16x64xbf16>
    %c0_38 = arith.constant 0 : index
    %c0_39 = arith.constant 0 : index
    %c0_40 = arith.constant 0 : index
    %79 = vector.load %arg10[%c0_38, %c0_39, %c0_40] : memref<1x64x32xbf16, #tpu.memory_space<vmem>>, vector<1x64x32xbf16>
    %80 = vector.shape_cast %79 : vector<1x64x32xbf16> to vector<64x32xbf16>
    %cst_41 = arith.constant dense<0.000000e+00> : vector<16x32xf32>
    %81 = tpu.matmul %78, %80, %cst_41 {dimension_numbers = #tpu.dot_dimension_numbers<[1], [0], [0], [1], [0, 0, 1, 1], [], []>} : vector<16x64xbf16>, vector<64x32xbf16>, vector<16x32xf32> -> vector<16x32xf32>
    %c0_42 = arith.constant 0 : index
    %c0_43 = arith.constant 0 : index
    %c0_44 = arith.constant 0 : index
    %82 = vector.load %arg11[%c0_42, %c0_43, %c0_44] : memref<1x1x32xf32, #tpu.memory_space<vmem>>, vector<1x1x32xf32>
    %83 = vector.shape_cast %82 : vector<1x1x32xf32> to vector<1x32xf32>
    %84 = vector.broadcast %83 : vector<1x32xf32> to vector<16x32xf32>
    %85 = arith.addf %81, %84 : vector<16x32xf32>
    %86 = arith.addf %67, %85 : vector<16x32xf32>
    %c0_45 = arith.constant 0 : index
    %c0_46 = arith.constant 0 : index
    %c0_47 = arith.constant 0 : index
    %87 = vector.load %arg12[%c0_45, %c0_46, %c0_47] : memref<1x1x32xf32, #tpu.memory_space<vmem>>, vector<1x1x32xf32>
    %88 = vector.shape_cast %87 : vector<1x1x32xf32> to vector<1x32xf32>
    %c0_48 = arith.constant 0 : index
    %c0_49 = arith.constant 0 : index
    %c0_50 = arith.constant 0 : index
    %89 = vector.load %arg13[%c0_48, %c0_49, %c0_50] : memref<1x1x32xf32, #tpu.memory_space<vmem>>, vector<1x1x32xf32>
    %90 = vector.shape_cast %89 : vector<1x1x32xf32> to vector<1x32xf32>
    %cst_51 = arith.constant dense<0.000000e+00> : vector<16xf32>
    %91 = vector.multi_reduction <add>, %86, %cst_51 [1] : vector<16x32xf32> to vector<16xf32>
    %92 = vector.shape_cast %91 : vector<16xf32> to vector<16x1xf32>
    %cst_52 = arith.constant 3.200000e+01 : f32
    %93 = vector.broadcast %cst_52 : f32 to vector<16x1xf32>
    %94 = arith.divf %92, %93 : vector<16x1xf32>
    %95 = vector.broadcast %94 : vector<16x1xf32> to vector<16x32xf32>
    %96 = arith.subf %86, %95 : vector<16x32xf32>
    %97 = arith.mulf %96, %96 : vector<16x32xf32>
    %cst_53 = arith.constant dense<0.000000e+00> : vector<16xf32>
    %98 = vector.multi_reduction <add>, %97, %cst_53 [1] : vector<16x32xf32> to vector<16xf32>
    %99 = vector.shape_cast %98 : vector<16xf32> to vector<16x1xf32>
    %cst_54 = arith.constant 3.200000e+01 : f32
    %100 = vector.broadcast %cst_54 : f32 to vector<16x1xf32>
    %101 = arith.divf %99, %100 : vector<16x1xf32>
    %cst_55 = arith.constant 9.99999974E-6 : f32
    %102 = vector.broadcast %cst_55 : f32 to vector<16x1xf32>
    %103 = arith.addf %101, %102 : vector<16x1xf32>
    %104 = math.rsqrt %103 : vector<16x1xf32>
    %105 = vector.broadcast %104 : vector<16x1xf32> to vector<16x32xf32>
    %106 = arith.mulf %96, %105 : vector<16x32xf32>
    %107 = vector.broadcast %88 : vector<1x32xf32> to vector<16x32xf32>
    %108 = arith.mulf %106, %107 : vector<16x32xf32>
    %109 = vector.broadcast %90 : vector<1x32xf32> to vector<16x32xf32>
    %110 = arith.addf %108, %109 : vector<16x32xf32>
    %c0_56 = arith.constant 0 : index
    %c0_57 = arith.constant 0 : index
    %111 = vector.load %arg19[%c0_56, %c0_57] : memref<16x32xf32, #tpu.memory_space<vmem>>, vector<16x32xf32>
    tpu.vector_store %arg19[%c0_56, %c0_57], %110 {strides = array<i32>} : memref<16x32xf32, #tpu.memory_space<vmem>>, vector<16x32xf32>,
    %c1_i32 = arith.constant 1 : i32
    %112 = arith.cmpi eq, %arg0, %c1_i32 : i32
    %113 = arith.extui %112 : i1 to i32
    %c0_i32_58 = arith.constant 0 : i32
    %114 = arith.cmpi ne, %113, %c0_i32_58 : i32
    scf.if %114 {
      %c0_59 = arith.constant 0 : index
      %c0_60 = arith.constant 0 : index
      %115 = vector.load %arg14[%c0_59, %c0_60] : memref<1x32xf32, #tpu.memory_space<vmem>>, vector<1x32xf32>
      %c0_61 = arith.constant 0 : index
      %c0_62 = arith.constant 0 : index
      %116 = vector.load %arg15[%c0_61, %c0_62] : memref<1x32xf32, #tpu.memory_space<vmem>>, vector<1x32xf32>
      %cst_63 = arith.constant dense<0.000000e+00> : vector<16xf32>
      %117 = vector.multi_reduction <add>, %110, %cst_63 [1] : vector<16x32xf32> to vector<16xf32>
      %118 = vector.shape_cast %117 : vector<16xf32> to vector<16x1xf32>
      %cst_64 = arith.constant 3.200000e+01 : f32
      %119 = vector.broadcast %cst_64 : f32 to vector<16x1xf32>
      %120 = arith.divf %118, %119 : vector<16x1xf32>
      %121 = vector.broadcast %120 : vector<16x1xf32> to vector<16x32xf32>
      %122 = arith.subf %110, %121 : vector<16x32xf32>
      %123 = arith.mulf %122, %122 : vector<16x32xf32>
      %cst_65 = arith.constant dense<0.000000e+00> : vector<16xf32>
      %124 = vector.multi_reduction <add>, %123, %cst_65 [1] : vector<16x32xf32> to vector<16xf32>
      %125 = vector.shape_cast %124 : vector<16xf32> to vector<16x1xf32>
      %cst_66 = arith.constant 3.200000e+01 : f32
      %126 = vector.broadcast %cst_66 : f32 to vector<16x1xf32>
      %127 = arith.divf %125, %126 : vector<16x1xf32>
      %cst_67 = arith.constant 9.99999974E-6 : f32
      %128 = vector.broadcast %cst_67 : f32 to vector<16x1xf32>
      %129 = arith.addf %127, %128 : vector<16x1xf32>
      %130 = math.rsqrt %129 : vector<16x1xf32>
      %131 = vector.broadcast %130 : vector<16x1xf32> to vector<16x32xf32>
      %132 = arith.mulf %122, %131 : vector<16x32xf32>
      %133 = vector.broadcast %115 : vector<1x32xf32> to vector<16x32xf32>
      %134 = arith.mulf %132, %133 : vector<16x32xf32>
      %135 = vector.broadcast %116 : vector<1x32xf32> to vector<16x32xf32>
      %136 = arith.addf %134, %135 : vector<16x32xf32>
      %137 = arith.truncf %136 : vector<16x32xf32> to vector<16x32xbf16>
      %c0_68 = arith.constant 0 : index
      %c0_69 = arith.constant 0 : index
      %138 = vector.load %arg16[%c0_68, %c0_69] : memref<32x16xbf16, #tpu.memory_space<vmem>>, vector<32x16xbf16>
      %cst_70 = arith.constant dense<0.000000e+00> : vector<16x16xf32>
      %139 = tpu.matmul %137, %138, %cst_70 {dimension_numbers = #tpu.dot_dimension_numbers<[1], [0], [0], [1], [0, 0, 1, 1], [], []>} : vector<16x32xbf16>, vector<32x16xbf16>, vector<16x16xf32> -> vector<16x16xf32>
      %c0_71 = arith.constant 0 : index
      %c0_72 = arith.constant 0 : index
      %140 = vector.load %arg17[%c0_71, %c0_72] : memref<1x16xf32, #tpu.memory_space<vmem>>, vector<1x16xf32>
      %141 = vector.broadcast %140 : vector<1x16xf32> to vector<16x16xf32>
      %142 = arith.addf %139, %141 : vector<16x16xf32>
      %c0_73 = arith.constant 0 : index
      %c0_74 = arith.constant 0 : index
      %143 = vector.load %arg18[%c0_73, %c0_74] : memref<16x16xf32, #tpu.memory_space<vmem>>, vector<16x16xf32>
      tpu.vector_store %arg18[%c0_73, %c0_74], %142 {strides = array<i32>} : memref<16x16xf32, #tpu.memory_space<vmem>>, vector<16x16xf32>,
    } else {
    }
    return
  }
  func.func @transform_0(%arg0: i32) -> (i32, i32) {
    %c0_i32 = arith.constant 0 : i32
    %c0_i32_0 = arith.constant 0 : i32
    %c0_i32_1 = arith.constant 0 : i32
    return %c0_i32, %c0_i32_0 : i32, i32
  }
  func.func @transform_1(%arg0: i32) -> (i32, i32, i32) {
    %c0_i32 = arith.constant 0 : i32
    %c0_i32_0 = arith.constant 0 : i32
    %c0_i32_1 = arith.constant 0 : i32
    return %arg0, %c0_i32, %c0_i32_0 : i32, i32, i32
  }
  func.func @transform_2(%arg0: i32) -> (i32, i32, i32) {
    %c0_i32 = arith.constant 0 : i32
    %c0_i32_0 = arith.constant 0 : i32
    %c0_i32_1 = arith.constant 0 : i32
    return %arg0, %c0_i32, %c0_i32_0 : i32, i32, i32
  }
  func.func @transform_3(%arg0: i32) -> (i32, i32, i32) {
    %c0_i32 = arith.constant 0 : i32
    %c0_i32_0 = arith.constant 0 : i32
    %c0_i32_1 = arith.constant 0 : i32
    return %arg0, %c0_i32, %c0_i32_0 : i32, i32, i32
  }
  func.func @transform_4(%arg0: i32) -> (i32, i32, i32) {
    %c0_i32 = arith.constant 0 : i32
    %c0_i32_0 = arith.constant 0 : i32
    %c0_i32_1 = arith.constant 0 : i32
    return %arg0, %c0_i32, %c0_i32_0 : i32, i32, i32
  }
  func.func @transform_5(%arg0: i32) -> (i32, i32, i32) {
    %c0_i32 = arith.constant 0 : i32
    %c0_i32_0 = arith.constant 0 : i32
    %c0_i32_1 = arith.constant 0 : i32
    return %arg0, %c0_i32, %c0_i32_0 : i32, i32, i32
  }
  func.func @transform_6(%arg0: i32) -> (i32, i32, i32) {
    %c0_i32 = arith.constant 0 : i32
    %c0_i32_0 = arith.constant 0 : i32
    %c0_i32_1 = arith.constant 0 : i32
    return %arg0, %c0_i32, %c0_i32_0 : i32, i32, i32
  }
  func.func @transform_7(%arg0: i32) -> (i32, i32, i32) {
    %c0_i32 = arith.constant 0 : i32
    %c0_i32_0 = arith.constant 0 : i32
    %c0_i32_1 = arith.constant 0 : i32
    return %arg0, %c0_i32, %c0_i32_0 : i32, i32, i32
  }
  func.func @transform_8(%arg0: i32) -> (i32, i32, i32) {
    %c0_i32 = arith.constant 0 : i32
    %c0_i32_0 = arith.constant 0 : i32
    %c0_i32_1 = arith.constant 0 : i32
    return %arg0, %c0_i32, %c0_i32_0 : i32, i32, i32
  }
  func.func @transform_9(%arg0: i32) -> (i32, i32, i32) {
    %c0_i32 = arith.constant 0 : i32
    %c0_i32_0 = arith.constant 0 : i32
    %c0_i32_1 = arith.constant 0 : i32
    return %arg0, %c0_i32, %c0_i32_0 : i32, i32, i32
  }
  func.func @transform_10(%arg0: i32) -> (i32, i32, i32) {
    %c0_i32 = arith.constant 0 : i32
    %c0_i32_0 = arith.constant 0 : i32
    %c0_i32_1 = arith.constant 0 : i32
    return %arg0, %c0_i32, %c0_i32_0 : i32, i32, i32
  }
  func.func @transform_11(%arg0: i32) -> (i32, i32, i32) {
    %c0_i32 = arith.constant 0 : i32
    %c0_i32_0 = arith.constant 0 : i32
    %c0_i32_1 = arith.constant 0 : i32
    return %arg0, %c0_i32, %c0_i32_0 : i32, i32, i32
  }
  func.func @transform_12(%arg0: i32) -> (i32, i32, i32) {
    %c0_i32 = arith.constant 0 : i32
    %c0_i32_0 = arith.constant 0 : i32
    %c0_i32_1 = arith.constant 0 : i32
    return %arg0, %c0_i32, %c0_i32_0 : i32, i32, i32
  }
  func.func @transform_13(%arg0: i32) -> (i32, i32) {
    %c0_i32 = arith.constant 0 : i32
    %c0_i32_0 = arith.constant 0 : i32
    %c0_i32_1 = arith.constant 0 : i32
    return %c0_i32, %c0_i32_0 : i32, i32
  }
  func.func @transform_14(%arg0: i32) -> (i32, i32) {
    %c0_i32 = arith.constant 0 : i32
    %c0_i32_0 = arith.constant 0 : i32
    %c0_i32_1 = arith.constant 0 : i32
    return %c0_i32, %c0_i32_0 : i32, i32
  }
  func.func @transform_15(%arg0: i32) -> (i32, i32) {
    %c0_i32 = arith.constant 0 : i32
    %c0_i32_0 = arith.constant 0 : i32
    %c0_i32_1 = arith.constant 0 : i32
    return %c0_i32, %c0_i32_0 : i32, i32
  }
  func.func @transform_16(%arg0: i32) -> (i32, i32) {
    %c0_i32 = arith.constant 0 : i32
    %c0_i32_0 = arith.constant 0 : i32
    %c0_i32_1 = arith.constant 0 : i32
    return %c0_i32, %c0_i32_0 : i32, i32
  }
  func.func @transform_17(%arg0: i32) -> (i32, i32) {
    %c0_i32 = arith.constant 0 : i32
    %c0_i32_0 = arith.constant 0 : i32
    %c0_i32_1 = arith.constant 0 : i32
    return %c0_i32, %c0_i32_0 : i32, i32
  }
}

</mosaic_0001>

<llo_original>
// kernel: encoder_forward.1
$region0: #{encoder_forward.1}
  #allocation0 [shape = 'u32[]', space=smem, size = 0x4, offset = 0x4, fixed_abs, tag = 'smem constant byte address 0x4 - core index']
  #allocation1 [shape = 'u32[144,128]{1,0:T(1,128)}', space=vmem, size = 0x12000, scoped, tag = 'internal scratch']
  #allocation2 [shape = 'f32[16,32]{1,0:T(8,128)}', space=vmem, size = 0x2000, scoped, tag = 'scratch operand']
  %s0 = inlined_call_operand.vmem [shape: f32[16,32], index: 0, kind: input, shape index: {}]
  %s1 = inlined_call_operand.vmem [shape: bf16[2,32,96], index: 1, kind: input, shape index: {}]
  %s2 = inlined_call_operand.vmem [shape: f32[2,1,96], index: 2, kind: input, shape index: {}]
  %s3 = inlined_call_operand.vmem [shape: bf16[2,32,32], index: 3, kind: input, shape index: {}]
  %s4 = inlined_call_operand.vmem [shape: f32[2,1,32], index: 4, kind: input, shape index: {}]
  %s5 = inlined_call_operand.vmem [shape: f32[2,1,32], index: 5, kind: input, shape index: {}]
  %s6 = inlined_call_operand.vmem [shape: f32[2,1,32], index: 6, kind: input, shape index: {}]
  %s7 = inlined_call_operand.vmem [shape: bf16[2,32,64], index: 7, kind: input, shape index: {}]
  %s8 = inlined_call_operand.vmem [shape: f32[2,1,64], index: 8, kind: input, shape index: {}]
  %s9 = inlined_call_operand.vmem [shape: bf16[2,64,32], index: 9, kind: input, shape index: {}]
  %s10 = inlined_call_operand.vmem [shape: f32[2,1,32], index: 10, kind: input, shape index: {}]
  %s11 = inlined_call_operand.vmem [shape: f32[2,1,32], index: 11, kind: input, shape index: {}]
  %s12 = inlined_call_operand.vmem [shape: f32[2,1,32], index: 12, kind: input, shape index: {}]
  %s13 = inlined_call_operand.vmem [shape: f32[1,32], index: 13, kind: input, shape index: {}]
  %s14 = inlined_call_operand.vmem [shape: f32[1,32], index: 14, kind: input, shape index: {}]
  %s15 = inlined_call_operand.vmem [shape: bf16[32,16], index: 15, kind: input, shape index: {}]
  %s16 = inlined_call_operand.vmem [shape: f32[1,16], index: 16, kind: input, shape index: {}]
  %s17 = inlined_call_operand.vmem [shape: f32[16,16], index: 17, kind: output, shape index: {}]
  %s18 = sld [smem:[#allocation0]]
  $region109: #{encoder_forward.1} parent=0
    _
  %s20 = ssub.s32 1, %s18
  %s21 = scalar_select 0, %s20, %s18
  loop: start=0, step=1, limit=4
  $region2: #{encoder_forward.1} parent=0 // loop_pre_header
    _
  $region3: #{encoder_forward.1} parent=0 // loop_header
    %s23 = sphi 0, %s27
    %p24 = scmp.ge.s32.totalorder %s23, 4
    %s31 = sphi 0, %s31
    %s33 = sphi 0, %s31
    %s34 = sphi 0, %s33
    %s48 = sphi 0, %s34
    %s54 = sphi 0, %s56
    %s57 = sphi 0, %s54
    %s58 = sphi 0, %s57
    %s74 = sphi 0, %s58
    %s80 = sphi 0, %s82
    %s83 = sphi 0, %s80
    %s84 = sphi 0, %s83
    %s100 = sphi 0, %s84
    %s106 = sphi 0, %s108
    %s109 = sphi 0, %s106
    %s110 = sphi 0, %s109
    %s126 = sphi 0, %s110
    %s132 = sphi 0, %s134
    %s135 = sphi 0, %s132
    %s136 = sphi 0, %s135
    %s152 = sphi 0, %s136
    %s158 = sphi 0, %s160
    %s161 = sphi 0, %s158
    %s162 = sphi 0, %s161
    %s178 = sphi 0, %s162
    %s184 = sphi 0, %s186
    %s187 = sphi 0, %s184
    %s188 = sphi 0, %s187
    %s204 = sphi 0, %s188
    %s210 = sphi 0, %s212
    %s213 = sphi 0, %s210
    %s214 = sphi 0, %s213
    %s230 = sphi 0, %s214
    %s236 = sphi 0, %s238
    %s239 = sphi 0, %s236
    %s240 = sphi 0, %s239
    %s256 = sphi 0, %s240
    %s262 = sphi 0, %s264
    %s265 = sphi 0, %s262
    %s266 = sphi 0, %s265
    %s282 = sphi 0, %s266
    %s288 = sphi 0, %s290
    %s291 = sphi 0, %s288
    %s292 = sphi 0, %s291
    %s308 = sphi 0, %s292
    %s314 = sphi 0, %s316
    %s317 = sphi 0, %s314
    %s318 = sphi 0, %s317
    %s334 = sphi 0, %s318
    %s340 = sphi 0, %s342
    %s343 = sphi 0, %s340
    %s344 = sphi 0, %s343
    %s360 = sphi 0, %s344
    %s364 = sphi 0, %s364
    %s366 = sphi 0, %s364
    %s367 = sphi 0, %s366
    %s381 = sphi 0, %s367
    %s385 = sphi 0, %s385
    %s387 = sphi 0, %s385
    %s388 = sphi 0, %s387
    %s402 = sphi 0, %s388
    %s406 = sphi 0, %s406
    %s408 = sphi 0, %s406
    %s409 = sphi 0, %s408
    %s423 = sphi 0, %s409
    %s427 = sphi 0, %s427
    %s429 = sphi 0, %s427
    %s430 = sphi 0, %s429
    %s444 = sphi 0, %s430
    %s448 = sphi 0, %s448
    %s450 = sphi 0, %s448
    %s451 = sphi 0, %s450
    %s465 = sphi 0, %s451
  $region4: #{encoder_forward.1} parent=0 // loop_header_branch
    %26 = sbr.rel (%p24) target = $region8
  $region5: #{encoder_forward.1} parent=0 // loop_body
    %s28 = ssub.s32 %s23, 1
    %s29 = ssub.s32 %s23, 2
    %s30 = sadd.s32 %s23, 1
    %s32 = sadd.s32 %s31, 1
    %p35 = scmp.eq.s32.totalorder %s23, 1
    %p36 = scmp.ne.s32.totalorder %s31, %s33
    %p37 = scmp.eq.s32.totalorder %s23, 0
    %p38 = por %p36, %p37
    %p39 = scmp.ne.s32.totalorder %s31, %s33
    %p40 = scmp.eq.s32.totalorder %s28, 1
    %p41 = por %p39, %p40
    %p42 = scmp.ne.s32.totalorder %s33, %s34
    %p43 = scmp.eq.s32.totalorder %s28, 0
    %p44 = por %p42, %p43
    %p45 = scmp.ne.s32.totalorder %s33, %s34
    %p46 = scmp.eq.s32.totalorder %s29, 1
    %p47 = por %p45, %p46
    %p49 = scmp.ne.s32.totalorder %s34, %s48
    %p50 = scmp.eq.s32.totalorder %s29, 0
    %p51 = por %p49, %p50
    %s52 = ssub.s32 %s23, %s30
    %p53 = scmp.eq.s32.totalorder %s52, 0
    %s55 = sadd.s32 %s54, 1
    %s56 = scalar_select %p53, %s54, %s55
    %p59 = pneg %p53
    %p60 = scmp.eq.s32.totalorder %s23, 1
    %p61 = por %p59, %p60
    %p62 = scmp.ne.s32.totalorder %s54, %s57
    %p63 = scmp.eq.s32.totalorder %s23, 0
    %p64 = por %p62, %p63
    %p65 = scmp.ne.s32.totalorder %s54, %s57
    %p66 = scmp.eq.s32.totalorder %s28, 1
    %p67 = por %p65, %p66
    %p68 = scmp.ne.s32.totalorder %s57, %s58
    %p69 = scmp.eq.s32.totalorder %s28, 0
    %p70 = por %p68, %p69
    %p71 = scmp.ne.s32.totalorder %s57, %s58
    %p72 = scmp.eq.s32.totalorder %s29, 1
    %p73 = por %p71, %p72
    %p75 = scmp.ne.s32.totalorder %s58, %s74
    %p76 = scmp.eq.s32.totalorder %s29, 0
    %p77 = por %p75, %p76
    %s78 = ssub.s32 %s23, %s30
    %p79 = scmp.eq.s32.totalorder %s78, 0
    %s81 = sadd.s32 %s80, 1
    %s82 = scalar_select %p79, %s80, %s81
    %p85 = pneg %p79
    %p86 = scmp.eq.s32.totalorder %s23, 1
    %p87 = por %p85, %p86
    %p88 = scmp.ne.s32.totalorder %s80, %s83
    %p89 = scmp.eq.s32.totalorder %s23, 0
    %p90 = por %p88, %p89
    %p91 = scmp.ne.s32.totalorder %s80, %s83
    %p92 = scmp.eq.s32.totalorder %s28, 1
    %p93 = por %p91, %p92
    %p94 = scmp.ne.s32.totalorder %s83, %s84
    %p95 = scmp.eq.s32.totalorder %s28, 0
    %p96 = por %p94, %p95
    %p97 = scmp.ne.s32.totalorder %s83, %s84
    %p98 = scmp.eq.s32.totalorder %s29, 1
    %p99 = por %p97, %p98
    %p101 = scmp.ne.s32.totalorder %s84, %s100
    %p102 = scmp.eq.s32.totalorder %s29, 0
    %p103 = por %p101, %p102
    %s104 = ssub.s32 %s23, %s30
    %p105 = scmp.eq.s32.totalorder %s104, 0
    %s107 = sadd.s32 %s106, 1
    %s108 = scalar_select %p105, %s106, %s107
    %p111 = pneg %p105
    %p112 = scmp.eq.s32.totalorder %s23, 1
    %p113 = por %p111, %p112
    %p114 = scmp.ne.s32.totalorder %s106, %s109
    %p115 = scmp.eq.s32.totalorder %s23, 0
    %p116 = por %p114, %p115
    %p117 = scmp.ne.s32.totalorder %s106, %s109
    %p118 = scmp.eq.s32.totalorder %s28, 1
    %p119 = por %p117, %p118
    %p120 = scmp.ne.s32.totalorder %s109, %s110
    %p121 = scmp.eq.s32.totalorder %s28, 0
    %p122 = por %p120, %p121
    %p123 = scmp.ne.s32.totalorder %s109, %s110
    %p124 = scmp.eq.s32.totalorder %s29, 1
    %p125 = por %p123, %p124
    %p127 = scmp.ne.s32.totalorder %s110, %s126
    %p128 = scmp.eq.s32.totalorder %s29, 0
    %p129 = por %p127, %p128
    %s130 = ssub.s32 %s23, %s30
    %p131 = scmp.eq.s32.totalorder %s130, 0
    %s133 = sadd.s32 %s132, 1
    %s134 = scalar_select %p131, %s132, %s133
    %p137 = pneg %p131
    %p138 = scmp.eq.s32.totalorder %s23, 1
    %p139 = por %p137, %p138
    %p140 = scmp.ne.s32.totalorder %s132, %s135
    %p141 = scmp.eq.s32.totalorder %s23, 0
    %p142 = por %p140, %p141
    %p143 = scmp.ne.s32.totalorder %s132, %s135
    %p144 = scmp.eq.s32.totalorder %s28, 1
    %p145 = por %p143, %p144
    %p146 = scmp.ne.s32.totalorder %s135, %s136
    %p147 = scmp.eq.s32.totalorder %s28, 0
    %p148 = por %p146, %p147
    %p149 = scmp.ne.s32.totalorder %s135, %s136
    %p150 = scmp.eq.s32.totalorder %s29, 1
    %p151 = por %p149, %p150
    %p153 = scmp.ne.s32.totalorder %s136, %s152
    %p154 = scmp.eq.s32.totalorder %s29, 0
    %p155 = por %p153, %p154
    %s156 = ssub.s32 %s23, %s30
    %p157 = scmp.eq.s32.totalorder %s156, 0
    %s159 = sadd.s32 %s158, 1
    %s160 = scalar_select %p157, %s158, %s159
    %p163 = pneg %p157
    %p164 = scmp.eq.s32.totalorder %s23, 1
    %p165 = por %p163, %p164
    %p166 = scmp.ne.s32.totalorder %s158, %s161
    %p167 = scmp.eq.s32.totalorder %s23, 0
    %p168 = por %p166, %p167
    %p169 = scmp.ne.s32.totalorder %s158, %s161
    %p170 = scmp.eq.s32.totalorder %s28, 1
    %p171 = por %p169, %p170
    %p172 = scmp.ne.s32.totalorder %s161, %s162
    %p173 = scmp.eq.s32.totalorder %s28, 0
    %p174 = por %p172, %p173
    %p175 = scmp.ne.s32.totalorder %s161, %s162
    %p176 = scmp.eq.s32.totalorder %s29, 1
    %p177 = por %p175, %p176
    %p179 = scmp.ne.s32.totalorder %s162, %s178
    %p180 = scmp.eq.s32.totalorder %s29, 0
    %p181 = por %p179, %p180
    %s182 = ssub.s32 %s23, %s30
    %p183 = scmp.eq.s32.totalorder %s182, 0
    %s185 = sadd.s32 %s184, 1
    %s186 = scalar_select %p183, %s184, %s185
    %p189 = pneg %p183
    %p190 = scmp.eq.s32.totalorder %s23, 1
    %p191 = por %p189, %p190
    %p192 = scmp.ne.s32.totalorder %s184, %s187
    %p193 = scmp.eq.s32.totalorder %s23, 0
    %p194 = por %p192, %p193
    %p195 = scmp.ne.s32.totalorder %s184, %s187
    %p196 = scmp.eq.s32.totalorder %s28, 1
    %p197 = por %p195, %p196
    %p198 = scmp.ne.s32.totalorder %s187, %s188
    %p199 = scmp.eq.s32.totalorder %s28, 0
    %p200 = por %p198, %p199
    %p201 = scmp.ne.s32.totalorder %s187, %s188
    %p202 = scmp.eq.s32.totalorder %s29, 1
    %p203 = por %p201, %p202
    %p205 = scmp.ne.s32.totalorder %s188, %s204
    %p206 = scmp.eq.s32.totalorder %s29, 0
    %p207 = por %p205, %p206
    %s208 = ssub.s32 %s23, %s30
    %p209 = scmp.eq.s32.totalorder %s208, 0
    %s211 = sadd.s32 %s210, 1
    %s212 = scalar_select %p209, %s210, %s211
    %p215 = pneg %p209
    %p216 = scmp.eq.s32.totalorder %s23, 1
    %p217 = por %p215, %p216
    %p218 = scmp.ne.s32.totalorder %s210, %s213
    %p219 = scmp.eq.s32.totalorder %s23, 0
    %p220 = por %p218, %p219
    %p221 = scmp.ne.s32.totalorder %s210, %s213
    %p222 = scmp.eq.s32.totalorder %s28, 1
    %p223 = por %p221, %p222
    %p224 = scmp.ne.s32.totalorder %s213, %s214
    %p225 = scmp.eq.s32.totalorder %s28, 0
    %p226 = por %p224, %p225
    %p227 = scmp.ne.s32.totalorder %s213, %s214
    %p228 = scmp.eq.s32.totalorder %s29, 1
    %p229 = por %p227, %p228
    %p231 = scmp.ne.s32.totalorder %s214, %s230
    %p232 = scmp.eq.s32.totalorder %s29, 0
    %p233 = por %p231, %p232
    %s234 = ssub.s32 %s23, %s30
    %p235 = scmp.eq.s32.totalorder %s234, 0
    %s237 = sadd.s32 %s236, 1
    %s238 = scalar_select %p235, %s236, %s237
    %p241 = pneg %p235
    %p242 = scmp.eq.s32.totalorder %s23, 1
    %p243 = por %p241, %p242
    %p244 = scmp.ne.s32.totalorder %s236, %s239
    %p245 = scmp.eq.s32.totalorder %s23, 0
    %p246 = por %p244, %p245
    %p247 = scmp.ne.s32.totalorder %s236, %s239
    %p248 = scmp.eq.s32.totalorder %s28, 1
    %p249 = por %p247, %p248
    %p250 = scmp.ne.s32.totalorder %s239, %s240
    %p251 = scmp.eq.s32.totalorder %s28, 0
    %p252 = por %p250, %p251
    %p253 = scmp.ne.s32.totalorder %s239, %s240
    %p254 = scmp.eq.s32.totalorder %s29, 1
    %p255 = por %p253, %p254
    %p257 = scmp.ne.s32.totalorder %s240, %s256
    %p258 = scmp.eq.s32.totalorder %s29, 0
    %p259 = por %p257, %p258
    %s260 = ssub.s32 %s23, %s30
    %p261 = scmp.eq.s32.totalorder %s260, 0
    %s263 = sadd.s32 %s262, 1
    %s264 = scalar_select %p261, %s262, %s263
    %p267 = pneg %p261
    %p268 = scmp.eq.s32.totalorder %s23, 1
    %p269 = por %p267, %p268
    %p270 = scmp.ne.s32.totalorder %s262, %s265
    %p271 = scmp.eq.s32.totalorder %s23, 0
    %p272 = por %p270, %p271
    %p273 = scmp.ne.s32.totalorder %s262, %s265
    %p274 = scmp.eq.s32.totalorder %s28, 1
    %p275 = por %p273, %p274
    %p276 = scmp.ne.s32.totalorder %s265, %s266
    %p277 = scmp.eq.s32.totalorder %s28, 0
    %p278 = por %p276, %p277
    %p279 = scmp.ne.s32.totalorder %s265, %s266
    %p280 = scmp.eq.s32.totalorder %s29, 1
    %p281 = por %p279, %p280
    %p283 = scmp.ne.s32.totalorder %s266, %s282
    %p284 = scmp.eq.s32.totalorder %s29, 0
    %p285 = por %p283, %p284
    %s286 = ssub.s32 %s23, %s30
    %p287 = scmp.eq.s32.totalorder %s286, 0
    %s289 = sadd.s32 %s288, 1
    %s290 = scalar_select %p287, %s288, %s289
    %p293 = pneg %p287
    %p294 = scmp.eq.s32.totalorder %s23, 1
    %p295 = por %p293, %p294
    %p296 = scmp.ne.s32.totalorder %s288, %s291
    %p297 = scmp.eq.s32.totalorder %s23, 0
    %p298 = por %p296, %p297
    %p299 = scmp.ne.s32.totalorder %s288, %s291
    %p300 = scmp.eq.s32.totalorder %s28, 1
    %p301 = por %p299, %p300
    %p302 = scmp.ne.s32.totalorder %s291, %s292
    %p303 = scmp.eq.s32.totalorder %s28, 0
    %p304 = por %p302, %p303
    %p305 = scmp.ne.s32.totalorder %s291, %s292
    %p306 = scmp.eq.s32.totalorder %s29, 1
    %p307 = por %p305, %p306
    %p309 = scmp.ne.s32.totalorder %s292, %s308
    %p310 = scmp.eq.s32.totalorder %s29, 0
    %p311 = por %p309, %p310
    %s312 = ssub.s32 %s23, %s30
    %p313 = scmp.eq.s32.totalorder %s312, 0
    %s315 = sadd.s32 %s314, 1
    %s316 = scalar_select %p313, %s314, %s315
    %p319 = pneg %p313
    %p320 = scmp.eq.s32.totalorder %s23, 1
    %p321 = por %p319, %p320
    %p322 = scmp.ne.s32.totalorder %s314, %s317
    %p323 = scmp.eq.s32.totalorder %s23, 0
    %p324 = por %p322, %p323
    %p325 = scmp.ne.s32.totalorder %s314, %s317
    %p326 = scmp.eq.s32.totalorder %s28, 1
    %p327 = por %p325, %p326
    %p328 = scmp.ne.s32.totalorder %s317, %s318
    %p329 = scmp.eq.s32.totalorder %s28, 0
    %p330 = por %p328, %p329
    %p331 = scmp.ne.s32.totalorder %s317, %s318
    %p332 = scmp.eq.s32.totalorder %s29, 1
    %p333 = por %p331, %p332
    %p335 = scmp.ne.s32.totalorder %s318, %s334
    %p336 = scmp.eq.s32.totalorder %s29, 0
    %p337 = por %p335, %p336
    %s338 = ssub.s32 %s23, %s30
    %p339 = scmp.eq.s32.totalorder %s338, 0
    %s341 = sadd.s32 %s340, 1
    %s342 = scalar_select %p339, %s340, %s341
    %p345 = pneg %p339
    %p346 = scmp.eq.s32.totalorder %s23, 1
    %p347 = por %p345, %p346
    %p348 = scmp.ne.s32.totalorder %s340, %s343
    %p349 = scmp.eq.s32.totalorder %s23, 0
    %p350 = por %p348, %p349
    %p351 = scmp.ne.s32.totalorder %s340, %s343
    %p352 = scmp.eq.s32.totalorder %s28, 1
    %p353 = por %p351, %p352
    %p354 = scmp.ne.s32.totalorder %s343, %s344
    %p355 = scmp.eq.s32.totalorder %s28, 0
    %p356 = por %p354, %p355
    %p357 = scmp.ne.s32.totalorder %s343, %s344
    %p358 = scmp.eq.s32.totalorder %s29, 1
    %p359 = por %p357, %p358
    %p361 = scmp.ne.s32.totalorder %s344, %s360
    %p362 = scmp.eq.s32.totalorder %s29, 0
    %p363 = por %p361, %p362
    %s365 = sadd.s32 %s364, 1
    %p368 = scmp.eq.s32.totalorder %s23, 1
    %p369 = scmp.ne.s32.totalorder %s364, %s366
    %p370 = scmp.eq.s32.totalorder %s23, 0
    %p371 = por %p369, %p370
    %p372 = scmp.ne.s32.totalorder %s364, %s366
    %p373 = scmp.eq.s32.totalorder %s28, 1
    %p374 = por %p372, %p373
    %p375 = scmp.ne.s32.totalorder %s366, %s367
    %p376 = scmp.eq.s32.totalorder %s28, 0
    %p377 = por %p375, %p376
    %p378 = scmp.ne.s32.totalorder %s366, %s367
    %p379 = scmp.eq.s32.totalorder %s29, 1
    %p380 = por %p378, %p379
    %p382 = scmp.ne.s32.totalorder %s367, %s381
    %p383 = scmp.eq.s32.totalorder %s29, 0
    %p384 = por %p382, %p383
    %s386 = sadd.s32 %s385, 1
    %p389 = scmp.eq.s32.totalorder %s23, 1
    %p390 = scmp.ne.s32.totalorder %s385, %s387
    %p391 = scmp.eq.s32.totalorder %s23, 0
    %p392 = por %p390, %p391
    %p393 = scmp.ne.s32.totalorder %s385, %s387
    %p394 = scmp.eq.s32.totalorder %s28, 1
    %p395 = por %p393, %p394
    %p396 = scmp.ne.s32.totalorder %s387, %s388
    %p397 = scmp.eq.s32.totalorder %s28, 0
    %p398 = por %p396, %p397
    %p399 = scmp.ne.s32.totalorder %s387, %s388
    %p400 = scmp.eq.s32.totalorder %s29, 1
    %p401 = por %p399, %p400
    %p403 = scmp.ne.s32.totalorder %s388, %s402
    %p404 = scmp.eq.s32.totalorder %s29, 0
    %p405 = por %p403, %p404
    %s407 = sadd.s32 %s406, 1
    %p410 = scmp.eq.s32.totalorder %s23, 1
    %p411 = scmp.ne.s32.totalorder %s406, %s408
    %p412 = scmp.eq.s32.totalorder %s23, 0
    %p413 = por %p411, %p412
    %p414 = scmp.ne.s32.totalorder %s406, %s408
    %p415 = scmp.eq.s32.totalorder %s28, 1
    %p416 = por %p414, %p415
    %p417 = scmp.ne.s32.totalorder %s408, %s409
    %p418 = scmp.eq.s32.totalorder %s28, 0
    %p419 = por %p417, %p418
    %p420 = scmp.ne.s32.totalorder %s408, %s409
    %p421 = scmp.eq.s32.totalorder %s29, 1
    %p422 = por %p420, %p421
    %p424 = scmp.ne.s32.totalorder %s409, %s423
    %p425 = scmp.eq.s32.totalorder %s29, 0
    %p426 = por %p424, %p425
    %s428 = sadd.s32 %s427, 1
    %p431 = scmp.eq.s32.totalorder %s23, 1
    %p432 = scmp.ne.s32.totalorder %s427, %s429
    %p433 = scmp.eq.s32.totalorder %s23, 0
    %p434 = por %p432, %p433
    %p435 = scmp.ne.s32.totalorder %s427, %s429
    %p436 = scmp.eq.s32.totalorder %s28, 1
    %p437 = por %p435, %p436
    %p438 = scmp.ne.s32.totalorder %s429, %s430
    %p439 = scmp.eq.s32.totalorder %s28, 0
    %p440 = por %p438, %p439
    %p441 = scmp.ne.s32.totalorder %s429, %s430
    %p442 = scmp.eq.s32.totalorder %s29, 1
    %p443 = por %p441, %p442
    %p445 = scmp.ne.s32.totalorder %s430, %s444
    %p446 = scmp.eq.s32.totalorder %s29, 0
    %p447 = por %p445, %p446
    %s449 = sadd.s32 %s448, 1
    %p452 = scmp.eq.s32.totalorder %s23, 1
    %p453 = scmp.ne.s32.totalorder %s448, %s450
    %p454 = scmp.eq.s32.totalorder %s23, 0
    %p455 = por %p453, %p454
    %p456 = scmp.ne.s32.totalorder %s448, %s450
    %p457 = scmp.eq.s32.totalorder %s28, 1
    %p458 = por %p456, %p457
    %p459 = scmp.ne.s32.totalorder %s450, %s451
    %p460 = scmp.eq.s32.totalorder %s28, 0
    %p461 = por %p459, %p460
    %p462 = scmp.ne.s32.totalorder %s450, %s451
    %p463 = scmp.eq.s32.totalorder %s29, 1
    %p464 = por %p462, %p463
    %p466 = scmp.ne.s32.totalorder %s451, %s465
    %p467 = scmp.eq.s32.totalorder %s29, 0
    %p468 = por %p466, %p467
    %p469 = scmp.le.s32.totalorder 1, %s23
    %p470 = scmp.lt.s32.totalorder %s23, 3
    %p471 = pnand %p469, %p470
    %p472 = pneg %p471
    // Predicated region
    $region9: #{encoder_forward.1} parent=5 // pred_check
      _
    $region10: #{encoder_forward.1} parent=5 // pred_check_branch
      %474 = sbr.rel (%p471) target = $region12
    $region11: #{encoder_forward.1} parent=5 // pred_region
      %s475 = ssub.s32 %s23, 1
      // Predicated region
      $region13: #{encoder_forward.1} parent=11 // pred_check
        %p476 = pneg %p44
      $region14: #{encoder_forward.1} parent=11 // pred_check_branch
        %478 = sbr.rel (%p476) target = $region16
      $region15: #{encoder_forward.1} parent=11 // pred_region
        _
      $region16: #{encoder_forward.1} parent=11 // pred_fallthru
        _
      // Predicated region
      $region17: #{encoder_forward.1} parent=11 // pred_check
        %p479 = pneg %p377
      $region18: #{encoder_forward.1} parent=11 // pred_check_branch
        %481 = sbr.rel (%p479) target = $region20
      $region19: #{encoder_forward.1} parent=11 // pred_region
        _
      $region20: #{encoder_forward.1} parent=11 // pred_fallthru
        _
      // Predicated region
      $region21: #{encoder_forward.1} parent=11 // pred_check
        %p482 = pneg %p398
      $region22: #{encoder_forward.1} parent=11 // pred_check_branch
        %484 = sbr.rel (%p482) target = $region24
      $region23: #{encoder_forward.1} parent=11 // pred_region
        _
      $region24: #{encoder_forward.1} parent=11 // pred_fallthru
        _
      // Predicated region
      $region25: #{encoder_forward.1} parent=11 // pred_check
        %p485 = pneg %p419
      $region26: #{encoder_forward.1} parent=11 // pred_check_branch
        %487 = sbr.rel (%p485) target = $region28
      $region27: #{encoder_forward.1} parent=11 // pred_region
        _
      $region28: #{encoder_forward.1} parent=11 // pred_fallthru
        _
      // Predicated region
      $region29: #{encoder_forward.1} parent=11 // pred_check
        %p488 = pneg %p440
      $region30: #{encoder_forward.1} parent=11 // pred_check_branch
        %490 = sbr.rel (%p488) target = $region32
      $region31: #{encoder_forward.1} parent=11 // pred_region
        _
      $region32: #{encoder_forward.1} parent=11 // pred_fallthru
        _
    $region12: #{encoder_forward.1} parent=5 // pred_fallthru
      _
    %p491 = scmp.lt.s32.totalorder %s23, 2
    // Predicated region
    $region33: #{encoder_forward.1} parent=5 // pred_check
      %p492 = pneg %p491
    $region34: #{encoder_forward.1} parent=5 // pred_check_branch
      %494 = sbr.rel (%p492) target = $region36
    $region35: #{encoder_forward.1} parent=5 // pred_region
      // Predicated region
      $region37: #{encoder_forward.1} parent=35 // pred_check
        %p495 = pneg %p64
      $region38: #{encoder_forward.1} parent=35 // pred_check_branch
        %497 = sbr.rel (%p495) target = $region40
      $region39: #{encoder_forward.1} parent=35 // pred_region
        %p498 = scmp.lt.s32.totalorder %s23, 1
        %s499 = scalar_select %p498, %s23, 1
        %s500 = smul.addr %s499, 4
        %s501 = smul.addr %s500, 4
        %s502 = scalar_lea.vmem %s1, %s501
      $region40: #{encoder_forward.1} parent=35 // pred_fallthru
        _
      // Predicated region
      $region41: #{encoder_forward.1} parent=35 // pred_check
        %p503 = pneg %p90
      $region42: #{encoder_forward.1} parent=35 // pred_check_branch
        %505 = sbr.rel (%p503) target = $region44
      $region43: #{encoder_forward.1} parent=35 // pred_region
        %p506 = scmp.lt.s32.totalorder %s23, 1
        %s507 = scalar_select %p506, %s23, 1
        %s508 = scalar_lea.vmem %s2, %s507
      $region44: #{encoder_forward.1} parent=35 // pred_fallthru
        _
      // Predicated region
      $region45: #{encoder_forward.1} parent=35 // pred_check
        %p509 = pneg %p116
      $region46: #{encoder_forward.1} parent=35 // pred_check_branch
        %511 = sbr.rel (%p509) target = $region48
      $region47: #{encoder_forward.1} parent=35 // pred_region
        %p512 = scmp.lt.s32.totalorder %s23, 1
        %s513 = scalar_select %p512, %s23, 1
        %s514 = smul.addr %s513, 4
        %s515 = smul.addr %s514, 4
        %s516 = scalar_lea.vmem %s3, %s515
      $region48: #{encoder_forward.1} parent=35 // pred_fallthru
        _
      // Predicated region
      $region49: #{encoder_forward.1} parent=35 // pred_check
        %p517 = pneg %p142
      $region50: #{encoder_forward.1} parent=35 // pred_check_branch
        %519 = sbr.rel (%p517) target = $region52
      $region51: #{encoder_forward.1} parent=35 // pred_region
        %p520 = scmp.lt.s32.totalorder %s23, 1
        %s521 = scalar_select %p520, %s23, 1
        %s522 = scalar_lea.vmem %s4, %s521
      $region52: #{encoder_forward.1} parent=35 // pred_fallthru
        _
      // Predicated region
      $region53: #{encoder_forward.1} parent=35 // pred_check
        %p523 = pneg %p168
      $region54: #{encoder_forward.1} parent=35 // pred_check_branch
        %525 = sbr.rel (%p523) target = $region56
      $region55: #{encoder_forward.1} parent=35 // pred_region
        %p526 = scmp.lt.s32.totalorder %s23, 1
        %s527 = scalar_select %p526, %s23, 1
        %s528 = scalar_lea.vmem %s5, %s527
      $region56: #{encoder_forward.1} parent=35 // pred_fallthru
        _
      // Predicated region
      $region57: #{encoder_forward.1} parent=35 // pred_check
        %p529 = pneg %p194
      $region58: #{encoder_forward.1} parent=35 // pred_check_branch
        %531 = sbr.rel (%p529) target = $region60
      $region59: #{encoder_forward.1} parent=35 // pred_region
        %p532 = scmp.lt.s32.totalorder %s23, 1
        %s533 = scalar_select %p532, %s23, 1
        %s534 = scalar_lea.vmem %s6, %s533
      $region60: #{encoder_forward.1} parent=35 // pred_fallthru
        _
      // Predicated region
      $region61: #{encoder_forward.1} parent=35 // pred_check
        %p535 = pneg %p220
      $region62: #{encoder_forward.1} parent=35 // pred_check_branch
        %537 = sbr.rel (%p535) target = $region64
      $region63: #{encoder_forward.1} parent=35 // pred_region
        %p538 = scmp.lt.s32.totalorder %s23, 1
        %s539 = scalar_select %p538, %s23, 1
        %s540 = smul.addr %s539, 4
        %s541 = smul.addr %s540, 4
        %s542 = scalar_lea.vmem %s7, %s541
      $region64: #{encoder_forward.1} parent=35 // pred_fallthru
        _
      // Predicated region
      $region65: #{encoder_forward.1} parent=35 // pred_check
        %p543 = pneg %p246
      $region66: #{encoder_forward.1} parent=35 // pred_check_branch
        %545 = sbr.rel (%p543) target = $region68
      $region67: #{encoder_forward.1} parent=35 // pred_region
        %p546 = scmp.lt.s32.totalorder %s23, 1
        %s547 = scalar_select %p546, %s23, 1
        %s548 = scalar_lea.vmem %s8, %s547
      $region68: #{encoder_forward.1} parent=35 // pred_fallthru
        _
      // Predicated region
      $region69: #{encoder_forward.1} parent=35 // pred_check
        %p549 = pneg %p272
      $region70: #{encoder_forward.1} parent=35 // pred_check_branch
        %551 = sbr.rel (%p549) target = $region72
      $region71: #{encoder_forward.1} parent=35 // pred_region
        %p552 = scmp.lt.s32.totalorder %s23, 1
        %s553 = scalar_select %p552, %s23, 1
        %s554 = smul.addr %s553, 8
        %s555 = smul.addr %s554, 4
        %s556 = scalar_lea.vmem %s9, %s555
      $region72: #{encoder_forward.1} parent=35 // pred_fallthru
        _
      // Predicated region
      $region73: #{encoder_forward.1} parent=35 // pred_check
        %p557 = pneg %p298
      $region74: #{encoder_forward.1} parent=35 // pred_check_branch
        %559 = sbr.rel (%p557) target = $region76
      $region75: #{encoder_forward.1} parent=35 // pred_region
        %p560 = scmp.lt.s32.totalorder %s23, 1
        %s561 = scalar_select %p560, %s23, 1
        %s562 = scalar_lea.vmem %s10, %s561
      $region76: #{encoder_forward.1} parent=35 // pred_fallthru
        _
      // Predicated region
      $region77: #{encoder_forward.1} parent=35 // pred_check
        %p563 = pneg %p324
      $region78: #{encoder_forward.1} parent=35 // pred_check_branch
        %565 = sbr.rel (%p563) target = $region80
      $region79: #{encoder_forward.1} parent=35 // pred_region
        %p566 = scmp.lt.s32.totalorder %s23, 1
        %s567 = scalar_select %p566, %s23, 1
        %s568 = scalar_lea.vmem %s11, %s567
      $region80: #{encoder_forward.1} parent=35 // pred_fallthru
        _
      // Predicated region
      $region81: #{encoder_forward.1} parent=35 // pred_check
        %p569 = pneg %p350
      $region82: #{encoder_forward.1} parent=35 // pred_check_branch
        %571 = sbr.rel (%p569) target = $region84
      $region83: #{encoder_forward.1} parent=35 // pred_region
        %p572 = scmp.lt.s32.totalorder %s23, 1
        %s573 = scalar_select %p572, %s23, 1
        %s574 = scalar_lea.vmem %s12, %s573
      $region84: #{encoder_forward.1} parent=35 // pred_fallthru
        _
    $region36: #{encoder_forward.1} parent=5 // pred_fallthru
      _
    %p575 = scmp.le.s32.totalorder 1, %s23
    %p576 = scmp.lt.s32.totalorder %s23, 3
    %p577 = pnand %p575, %p576
    %p578 = pneg %p577
    // Predicated region
    $region85: #{encoder_forward.1} parent=5 // pred_check
      _
    $region86: #{encoder_forward.1} parent=5 // pred_check_branch
      %580 = sbr.rel (%p577) target = $region88
    $region87: #{encoder_forward.1} parent=5 // pred_region
      %s581 = ssub.s32 %s23, 1
      %p582 = pneg %p44
      %p583 = pneg %p41
      %p584 = scmp.lt.s32.totalorder %s28, 1
      %s585 = scalar_select %p584, %s28, 1
      %s586 = smul.addr %s585, 4
      %s587 = smul.addr %s586, 4
      %s588 = scalar_lea.vmem %s1, %s587
      %p589 = pneg %p70
      %p590 = pneg %p67
      %p591 = scmp.lt.s32.totalorder %s28, 1
      %s592 = scalar_select %p591, %s28, 1
      %s593 = scalar_lea.vmem %s2, %s592
      %p594 = pneg %p96
      %p595 = pneg %p93
      %p596 = scmp.lt.s32.totalorder %s28, 1
      %s597 = scalar_select %p596, %s28, 1
      %s598 = smul.addr %s597, 4
      %s599 = smul.addr %s598, 4
      %s600 = scalar_lea.vmem %s3, %s599
      %p601 = pneg %p122
      %p602 = pneg %p119
      %p603 = scmp.lt.s32.totalorder %s28, 1
      %s604 = scalar_select %p603, %s28, 1
      %s605 = scalar_lea.vmem %s4, %s604
      %p606 = pneg %p148
      %p607 = pneg %p145
      %p608 = scmp.lt.s32.totalorder %s28, 1
      %s609 = scalar_select %p608, %s28, 1
      %s610 = scalar_lea.vmem %s5, %s609
      %p611 = pneg %p174
      %p612 = pneg %p171
      %p613 = scmp.lt.s32.totalorder %s28, 1
      %s614 = scalar_select %p613, %s28, 1
      %s615 = scalar_lea.vmem %s6, %s614
      %p616 = pneg %p200
      %p617 = pneg %p197
      %p618 = scmp.lt.s32.totalorder %s28, 1
      %s619 = scalar_select %p618, %s28, 1
      %s620 = smul.addr %s619, 4
      %s621 = smul.addr %s620, 4
      %s622 = scalar_lea.vmem %s7, %s621
      %p623 = pneg %p226
      %p624 = pneg %p223
      %p625 = scmp.lt.s32.totalorder %s28, 1
      %s626 = scalar_select %p625, %s28, 1
      %s627 = scalar_lea.vmem %s8, %s626
      %p628 = pneg %p252
      %p629 = pneg %p249
      %p630 = scmp.lt.s32.totalorder %s28, 1
      %s631 = scalar_select %p630, %s28, 1
      %s632 = smul.addr %s631, 8
      %s633 = smul.addr %s632, 4
      %s634 = scalar_lea.vmem %s9, %s633
      %p635 = pneg %p278
      %p636 = pneg %p275
      %p637 = scmp.lt.s32.totalorder %s28, 1
      %s638 = scalar_select %p637, %s28, 1
      %s639 = scalar_lea.vmem %s10, %s638
      %p640 = pneg %p304
      %p641 = pneg %p301
      %p642 = scmp.lt.s32.totalorder %s28, 1
      %s643 = scalar_select %p642, %s28, 1
      %s644 = scalar_lea.vmem %s11, %s643
      %p645 = pneg %p330
      %p646 = pneg %p327
      %p647 = scmp.lt.s32.totalorder %s28, 1
      %s648 = scalar_select %p647, %s28, 1
      %s649 = scalar_lea.vmem %s12, %s648
      %p650 = pneg %p356
      %p651 = pneg %p353
      %p652 = pneg %p377
      %p653 = pneg %p374
      %p654 = pneg %p398
      %p655 = pneg %p395
      %p656 = pneg %p419
      %p657 = pneg %p416
      %p658 = pneg %p440
      %p659 = pneg %p437
      %p660 = pneg %p461
      %p661 = pneg %p458
      %p662 = scmp.lt.s32.totalorder %s28, 1
      %s663 = scalar_select %p662, %s28, 1
      %s664 = smul.addr %s663, 4
      %s665 = smul.addr %s664, 4
      %s666 = scalar_lea.vmem %s1, %s665
      %p667 = scmp.lt.s32.totalorder %s28, 1
      %s668 = scalar_select %p667, %s28, 1
      %s669 = scalar_lea.vmem %s2, %s668
      %p670 = scmp.lt.s32.totalorder %s28, 1
      %s671 = scalar_select %p670, %s28, 1
      %s672 = smul.addr %s671, 4
      %s673 = smul.addr %s672, 4
      %s674 = scalar_lea.vmem %s3, %s673
      %p675 = scmp.lt.s32.totalorder %s28, 1
      %s676 = scalar_select %p675, %s28, 1
      %s677 = scalar_lea.vmem %s4, %s676
      %p678 = scmp.lt.s32.totalorder %s28, 1
      %s679 = scalar_select %p678, %s28, 1
      %s680 = scalar_lea.vmem %s5, %s679
      %p681 = scmp.lt.s32.totalorder %s28, 1
      %s682 = scalar_select %p681, %s28, 1
      %s683 = scalar_lea.vmem %s6, %s682
      %p684 = scmp.lt.s32.totalorder %s28, 1
      %s685 = scalar_select %p684, %s28, 1
      %s686 = smul.addr %s685, 4
      %s687 = smul.addr %s686, 4
      %s688 = scalar_lea.vmem %s7, %s687
      %p689 = scmp.lt.s32.totalorder %s28, 1
      %s690 = scalar_select %p689, %s28, 1
      %s691 = scalar_lea.vmem %s8, %s690
      %p692 = scmp.lt.s32.totalorder %s28, 1
      %s693 = scalar_select %p692, %s28, 1
      %s694 = smul.addr %s693, 8
      %s695 = smul.addr %s694, 4
      %s696 = scalar_lea.vmem %s9, %s695
      %p697 = scmp.lt.s32.totalorder %s28, 1
      %s698 = scalar_select %p697, %s28, 1
      %s699 = scalar_lea.vmem %s10, %s698
      %p700 = scmp.lt.s32.totalorder %s28, 1
      %s701 = scalar_select %p700, %s28, 1
      %s702 = scalar_lea.vmem %s11, %s701
      %p703 = scmp.lt.s32.totalorder %s28, 1
      %s704 = scalar_select %p703, %s28, 1
      %s705 = scalar_lea.vmem %s12, %s704
      %p707 = scmp.eq.s32.totalorder %s28, 0
      // Predicated region
      $region89: #{encoder_forward.1} parent=87 // pred_check
        %p708 = pneg %p707
      $region90: #{encoder_forward.1} parent=87 // pred_check_branch
        %710 = sbr.rel (%p708) target = $region92
      $region91: #{encoder_forward.1} parent=87 // pred_region
        %v711 = vld [vmem:[%s0] sm:$0xff]
        %v712 = vld [vmem:[%s0 + $0x8] sm:$0xff]
        %vm713 = vcmask 261120
        %714 = vst.msk [vmem:[#allocation2] sm:$0xff] %vm713, %v711
        %715 = vst.msk [vmem:[#allocation2 + $0x8] sm:$0xff] %vm713, %v712
      $region92: #{encoder_forward.1} parent=87 // pred_fallthru
        _
      %v716 = vld [vmem:[#allocation2] sm:$0xff]
      %v717 = vld [vmem:[#allocation2 + $0x8] sm:$0xff]
      %v718 = vpack.c.bf16 %v717, %v716
      %v719 = vld [vmem:[%s666] sm:$0xf]
      %v720 = vld [vmem:[%s666 + $0x4] sm:$0xf]
      %v721 = vld [vmem:[%s666 + $0x8] sm:$0xf]
      %v722 = vld [vmem:[%s666 + $0xc] sm:$0xf]
      %v723 = vld [vmem:[%s669] sm:$0x1]
      %v725 = vlaneseq
      %v726 = vshrl.u32 %v725, 7
      %v727 = vsub.s32 0, %v726
      %v728 = vrot.slane %v723, %v727
      %v734 = vunpack.c.l.b16 %v719
      %v735 = vunpack.c.l.b16 %v720
      %v736 = vunpack.c.l.b16 %v721
      %v737 = vunpack.c.l.b16 %v722
      %v738 = vpack.c.b16 %v735, %v734
      %v739 = vpack.c.b16 %v737, %v736
      %vm742 = vcmask 261120
      %v744 = vsel %vm742, %v718, 0
      %746 = vmatprep.subr.bf16.mxu0 0
      %747 = vmatpush1.bf16.msra.mxu0 %v738
      %748 = vmatprep.subr.bf16.mxu0 0
      %749 = vmatpush1.bf16.msra.mxu0 %v739
      %750 = vmatprep.subr.bf16.mxu0 0
      %751 = vmatpush1.bf16.msra.mxu0 0
      %752 = vmatprep.subr.bf16.mxu0 0
      %753 = vmatpush1.bf16.msra.mxu0 0
      %754 = vmatprep.subr.bf16.mxu0 0
      %755 = vmatpush1.bf16.msra.mxu0 0
      %756 = vmatprep.subr.bf16.mxu0 0
      %757 = vmatpush1.bf16.msra.mxu0 0
      %758 = vmatprep.subr.bf16.mxu0 0
      %759 = vmatpush1.bf16.msra.mxu0 0
      %760 = vmatprep.subr.bf16.mxu0 0
      %761 = vmatpush1.bf16.msra.mxu0 0
      %762 = vmatprep.subr.bf16.mxu0 0
      %763 = vmatpush1.bf16.msra.mxu0 0
      %764 = vmatprep.subr.bf16.mxu0 0
      %765 = vmatpush1.bf16.msra.mxu0 0
      %766 = vmatprep.subr.bf16.mxu0 0
      %767 = vmatpush1.bf16.msra.mxu0 0
      %768 = vmatprep.subr.bf16.mxu0 0
      %769 = vmatpush1.bf16.msra.mxu0 0
      %770 = vmatprep.subr.bf16.mxu0 0
      %771 = vmatpush1.bf16.msra.mxu0 0
      %772 = vmatprep.subr.bf16.mxu0 0
      %773 = vmatpush1.bf16.msra.mxu0 0
      %774 = vmatprep.subr.bf16.mxu0 0
      %775 = vmatpush1.bf16.msra.mxu0 0
      %776 = vmatprep.subr.bf16.mxu0 0
      %777 = vmatpush1.bf16.msra.mxu0 0
      %778 = vmatprep.mubr.bf16.mxu0 0
      %779 = vmatmul.mubr.bf16.gmra.mrb[0].mxu0 %v744
      %v780 = vpop.f32.mrb[0].mxu0
      %v781 = vadd.f32 %v728, %v780
      %v782 = vpop.f32.mrb[0].mxu0
      %v783 = vpop.f32.mrb[0].mxu0
      %v784 = vadd.f32 %v728, %v783
      %v785 = vpop.f32.mrb[0].mxu0
      %786 = vdwg.mxu0
      %v787 = vpack.c.bf16 %v781, %v781
      %v788 = vpack.c.bf16 %v784, %v784
      %790 = vrot.lane.b32.xlu0 %v787, 96
      %v791 = vpop.permute.xlu0 %790
      %v793 = vsel %vm742, %v787, 0
      %v796 = vsel %vm742, %v791, 0
      %798 = vmatprep.subr.bf16.mxu0 0
      %799 = vmatpush1.bf16.xpose.msra.mxu0 %v796
      %800 = vmatprep.subr.bf16.mxu0 0
      %801 = vmatpush1.bf16.xpose.msra.mxu0 0
      %802 = vmatprep.subr.bf16.mxu0 0
      %803 = vmatpush1.bf16.xpose.msra.mxu0 0
      %804 = vmatprep.subr.bf16.mxu0 0
      %805 = vmatpush1.bf16.xpose.msra.mxu0 0
      %806 = vmatprep.subr.bf16.mxu0 0
      %807 = vmatpush1.bf16.xpose.msra.mxu0 0
      %808 = vmatprep.subr.bf16.mxu0 0
      %809 = vmatpush1.bf16.xpose.msra.mxu0 0
      %810 = vmatprep.subr.bf16.mxu0 0
      %811 = vmatpush1.bf16.xpose.msra.mxu0 0
      %812 = vmatprep.subr.bf16.mxu0 0
      %813 = vmatpush1.bf16.xpose.msra.mxu0 0
      %814 = vmatprep.subr.bf16.mxu0 0
      %815 = vmatpush1.bf16.xpose.msra.mxu0 0
      %816 = vmatprep.subr.bf16.mxu0 0
      %817 = vmatpush1.bf16.xpose.msra.mxu0 0
      %818 = vmatprep.subr.bf16.mxu0 0
      %819 = vmatpush1.bf16.xpose.msra.mxu0 0
      %820 = vmatprep.subr.bf16.mxu0 0
      %821 = vmatpush1.bf16.xpose.msra.mxu0 0
      %822 = vmatprep.subr.bf16.mxu0 0
      %823 = vmatpush1.bf16.xpose.msra.mxu0 0
      %824 = vmatprep.subr.bf16.mxu0 0
      %825 = vmatpush1.bf16.xpose.msra.mxu0 0
      %826 = vmatprep.subr.bf16.mxu0 0
      %827 = vmatpush1.bf16.xpose.msra.mxu0 0
      %828 = vmatprep.subr.bf16.mxu0 0
      %829 = vmatpush1.bf16.xpose.msra.mxu0 0
      %830 = vmatprep.mubr.bf16.mxu0 0
      %831 = vmatmul.mubr.bf16.gmra.mrb[0].mxu0 %v793
      %v832 = vpop.f32.mrb[0].mxu0
      %v833 = vadd.f32 0.0, %v832
      %v834 = vpop.f32.mrb[0].mxu0
      %v835 = vpop.f32.mrb[0].mxu0
      %v836 = vpop.f32.mrb[0].mxu0
      %837 = vdwg.mxu0
      %839 = vrot.lane.b32.xlu0 %v788, 96
      %v840 = vpop.permute.xlu0 %839
      %v842 = vsel %vm742, %v788, 0
      %v845 = vsel %vm742, %v840, 0
      %847 = vmatprep.subr.bf16.mxu0 0
      %848 = vmatpush1.bf16.xpose.msra.mxu0 %v845
      %849 = vmatprep.subr.bf16.mxu0 0
      %850 = vmatpush1.bf16.xpose.msra.mxu0 0
      %851 = vmatprep.subr.bf16.mxu0 0
      %852 = vmatpush1.bf16.xpose.msra.mxu0 0
      %853 = vmatprep.subr.bf16.mxu0 0
      %854 = vmatpush1.bf16.xpose.msra.mxu0 0
      %855 = vmatprep.subr.bf16.mxu0 0
      %856 = vmatpush1.bf16.xpose.msra.mxu0 0
      %857 = vmatprep.subr.bf16.mxu0 0
      %858 = vmatpush1.bf16.xpose.msra.mxu0 0
      %859 = vmatprep.subr.bf16.mxu0 0
      %860 = vmatpush1.bf16.xpose.msra.mxu0 0
      %861 = vmatprep.subr.bf16.mxu0 0
      %862 = vmatpush1.bf16.xpose.msra.mxu0 0
      %863 = vmatprep.subr.bf16.mxu0 0
      %864 = vmatpush1.bf16.xpose.msra.mxu0 0
      %865 = vmatprep.subr.bf16.mxu0 0
      %866 = vmatpush1.bf16.xpose.msra.mxu0 0
      %867 = vmatprep.subr.bf16.mxu0 0
      %868 = vmatpush1.bf16.xpose.msra.mxu0 0
      %869 = vmatprep.subr.bf16.mxu0 0
      %870 = vmatpush1.bf16.xpose.msra.mxu0 0
      %871 = vmatprep.subr.bf16.mxu0 0
      %872 = vmatpush1.bf16.xpose.msra.mxu0 0
      %873 = vmatprep.subr.bf16.mxu0 0
      %874 = vmatpush1.bf16.xpose.msra.mxu0 0
      %875 = vmatprep.subr.bf16.mxu0 0
      %876 = vmatpush1.bf16.xpose.msra.mxu0 0
      %877 = vmatprep.subr.bf16.mxu0 0
      %878 = vmatpush1.bf16.xpose.msra.mxu0 0
      %879 = vmatprep.mubr.bf16.mxu0 0
      %880 = vmatmul.mubr.bf16.gmra.mrb[0].mxu0 %v842
      %v881 = vpop.f32.mrb[0].mxu0
      %v882 = vadd.f32 0.0, %v881
      %v883 = vpop.f32.mrb[0].mxu0
      %v884 = vpop.f32.mrb[0].mxu0
      %v885 = vpop.f32.mrb[0].mxu0
      %886 = vdwg.mxu0
      %vm887 = vcmask 64512
      %v888 = vsel %vm887, %v833, -inf
      %889 = vmax.xlane.f32.xlu0 %v888
      %v890 = vpop.xlane.xlu0 %889
      %v891 = vsel %vm887, %v882, -inf
      %892 = vmax.xlane.f32.xlu0 %v891
      %v893 = vpop.xlane.xlu0 %892
      %v894 = vsub.f32 %v833, %v890
      %v895 = vsub.f32 %v882, %v893
      %v896 = vmul.f32 %v894, 1.442695
      %v897 = vpow.pop %v896
      %v898 = vmul.f32 %v895, 1.442695
      %v899 = vpow.pop %v898
      %v900 = vsel %vm887, %v897, 0.0
      %901 = vadd.xlane.f32.xlu0 %v900
      %v902 = vpop.xlane.xlu0 %901
      %v903 = vsel %vm887, %v899, 0.0
      %904 = vadd.xlane.f32.xlu0 %v903
      %v905 = vpop.xlane.xlu0 %904
      %v906 = vrcp.pop %v902
      %v907 = vrcp.pop %v905
      %v908 = vmul.f32 %v897, %v906
      %v909 = vmul.f32 %v899, %v907
      %v910 = vpack.c.bf16 %v908, %v908
      %v911 = vpack.c.bf16 %v909, %v909
      %912 = vrot.lane.b32.xlu0 %v787, 64
      %v913 = vpop.permute.xlu0 %912
      %v915 = vsel %vm887, %v910, 0
      %vm917 = vcmask 1043456
      %v919 = vsel %vm917, %v913, 0
      %921 = vmatprep.subr.bf16.mxu0 0
      %922 = vmatpush1.bf16.msra.mxu0 %v919
      %923 = vmatprep.subr.bf16.mxu0 0
      %924 = vmatpush1.bf16.msra.mxu0 0
      %925 = vmatprep.subr.bf16.mxu0 0
      %926 = vmatpush1.bf16.msra.mxu0 0
      %927 = vmatprep.subr.bf16.mxu0 0
      %928 = vmatpush1.bf16.msra.mxu0 0
      %929 = vmatprep.subr.bf16.mxu0 0
      %930 = vmatpush1.bf16.msra.mxu0 0
      %931 = vmatprep.subr.bf16.mxu0 0
      %932 = vmatpush1.bf16.msra.mxu0 0
      %933 = vmatprep.subr.bf16.mxu0 0
      %934 = vmatpush1.bf16.msra.mxu0 0
      %935 = vmatprep.subr.bf16.mxu0 0
      %936 = vmatpush1.bf16.msra.mxu0 0
      %937 = vmatprep.subr.bf16.mxu0 0
      %938 = vmatpush1.bf16.msra.mxu0 0
      %939 = vmatprep.subr.bf16.mxu0 0
      %940 = vmatpush1.bf16.msra.mxu0 0
      %941 = vmatprep.subr.bf16.mxu0 0
      %942 = vmatpush1.bf16.msra.mxu0 0
      %943 = vmatprep.subr.bf16.mxu0 0
      %944 = vmatpush1.bf16.msra.mxu0 0
      %945 = vmatprep.subr.bf16.mxu0 0
      %946 = vmatpush1.bf16.msra.mxu0 0
      %947 = vmatprep.subr.bf16.mxu0 0
      %948 = vmatpush1.bf16.msra.mxu0 0
      %949 = vmatprep.subr.bf16.mxu0 0
      %950 = vmatpush1.bf16.msra.mxu0 0
      %951 = vmatprep.subr.bf16.mxu0 0
      %952 = vmatpush1.bf16.msra.mxu0 0
      %953 = vmatprep.mubr.bf16.mxu0 0
      %954 = vmatmul.mubr.bf16.gmra.mrb[0].mxu0 %v915
      %v955 = vpop.f32.mrb[0].mxu0
      %v956 = vadd.f32 0.0, %v955
      %v957 = vpop.f32.mrb[0].mxu0
      %v958 = vpop.f32.mrb[0].mxu0
      %v959 = vpop.f32.mrb[0].mxu0
      %960 = vdwg.mxu0
      %961 = vrot.lane.b32.xlu0 %v788, 64
      %v962 = vpop.permute.xlu0 %961
      %v964 = vsel %vm887, %v911, 0
      %v967 = vsel %vm917, %v962, 0
      %969 = vmatprep.subr.bf16.mxu0 0
      %970 = vmatpush1.bf16.msra.mxu0 %v967
      %971 = vmatprep.subr.bf16.mxu0 0
      %972 = vmatpush1.bf16.msra.mxu0 0
      %973 = vmatprep.subr.bf16.mxu0 0
      %974 = vmatpush1.bf16.msra.mxu0 0
      %975 = vmatprep.subr.bf16.mxu0 0
      %976 = vmatpush1.bf16.msra.mxu0 0
      %977 = vmatprep.subr.bf16.mxu0 0
      %978 = vmatpush1.bf16.msra.mxu0 0
      %979 = vmatprep.subr.bf16.mxu0 0
      %980 = vmatpush1.bf16.msra.mxu0 0
      %981 = vmatprep.subr.bf16.mxu0 0
      %982 = vmatpush1.bf16.msra.mxu0 0
      %983 = vmatprep.subr.bf16.mxu0 0
      %984 = vmatpush1.bf16.msra.mxu0 0
      %985 = vmatprep.subr.bf16.mxu0 0
      %986 = vmatpush1.bf16.msra.mxu0 0
      %987 = vmatprep.subr.bf16.mxu0 0
      %988 = vmatpush1.bf16.msra.mxu0 0
      %989 = vmatprep.subr.bf16.mxu0 0
      %990 = vmatpush1.bf16.msra.mxu0 0
      %991 = vmatprep.subr.bf16.mxu0 0
      %992 = vmatpush1.bf16.msra.mxu0 0
      %993 = vmatprep.subr.bf16.mxu0 0
      %994 = vmatpush1.bf16.msra.mxu0 0
      %995 = vmatprep.subr.bf16.mxu0 0
      %996 = vmatpush1.bf16.msra.mxu0 0
      %997 = vmatprep.subr.bf16.mxu0 0
      %998 = vmatpush1.bf16.msra.mxu0 0
      %999 = vmatprep.subr.bf16.mxu0 0
      %1000 = vmatpush1.bf16.msra.mxu0 0
      %1001 = vmatprep.mubr.bf16.mxu0 0
      %1002 = vmatmul.mubr.bf16.gmra.mrb[0].mxu0 %v964
      %v1003 = vpop.f32.mrb[0].mxu0
      %v1004 = vadd.f32 0.0, %v1003
      %v1005 = vpop.f32.mrb[0].mxu0
      %v1006 = vpop.f32.mrb[0].mxu0
      %v1007 = vpop.f32.mrb[0].mxu0
      %1008 = vdwg.mxu0
      %v1009 = vpack.c.bf16 %v1004, %v956
      %v1010 = vld [vmem:[%s674] sm:$0xf]
      %v1011 = vld [vmem:[%s674 + $0x4] sm:$0xf]
      %v1012 = vld [vmem:[%s674 + $0x8] sm:$0xf]
      %v1013 = vld [vmem:[%s674 + $0xc] sm:$0xf]
      %v1014 = vld [vmem:[%s677] sm:$0x1]
      %v1016 = vlaneseq
      %v1017 = vshrl.u32 %v1016, 7
      %v1018 = vsub.s32 0, %v1017
      %v1019 = vrot.slane %v1014, %v1018
      %v1025 = vunpack.c.l.b16 %v1010
      %v1026 = vunpack.c.l.b16 %v1011
      %v1027 = vunpack.c.l.b16 %v1012
      %v1028 = vunpack.c.l.b16 %v1013
      %v1029 = vpack.c.b16 %v1026, %v1025
      %v1030 = vpack.c.b16 %v1028, %v1027
      %v1034 = vsel %vm742, %v1009, 0
      %1036 = vmatprep.subr.bf16.mxu0 0
      %1037 = vmatpush1.bf16.msra.mxu0 %v1029
      %1038 = vmatprep.subr.bf16.mxu0 0
      %1039 = vmatpush1.bf16.msra.mxu0 %v1030
      %1040 = vmatprep.subr.bf16.mxu0 0
      %1041 = vmatpush1.bf16.msra.mxu0 0
      %1042 = vmatprep.subr.bf16.mxu0 0
      %1043 = vmatpush1.bf16.msra.mxu0 0
      %1044 = vmatprep.subr.bf16.mxu0 0
      %1045 = vmatpush1.bf16.msra.mxu0 0
      %1046 = vmatprep.subr.bf16.mxu0 0
      %1047 = vmatpush1.bf16.msra.mxu0 0
      %1048 = vmatprep.subr.bf16.mxu0 0
      %1049 = vmatpush1.bf16.msra.mxu0 0
      %1050 = vmatprep.subr.bf16.mxu0 0
      %1051 = vmatpush1.bf16.msra.mxu0 0
      %1052 = vmatprep.subr.bf16.mxu0 0
      %1053 = vmatpush1.bf16.msra.mxu0 0
      %1054 = vmatprep.subr.bf16.mxu0 0
      %1055 = vmatpush1.bf16.msra.mxu0 0
      %1056 = vmatprep.subr.bf16.mxu0 0
      %1057 = vmatpush1.bf16.msra.mxu0 0
      %1058 = vmatprep.subr.bf16.mxu0 0
      %1059 = vmatpush1.bf16.msra.mxu0 0
      %1060 = vmatprep.subr.bf16.mxu0 0
      %1061 = vmatpush1.bf16.msra.mxu0 0
      %1062 = vmatprep.subr.bf16.mxu0 0
      %1063 = vmatpush1.bf16.msra.mxu0 0
      %1064 = vmatprep.subr.bf16.mxu0 0
      %1065 = vmatpush1.bf16.msra.mxu0 0
      %1066 = vmatprep.subr.bf16.mxu0 0
      %1067 = vmatpush1.bf16.msra.mxu0 0
      %1068 = vmatprep.mubr.bf16.mxu0 0
      %1069 = vmatmul.mubr.bf16.gmra.mrb[0].mxu0 %v1034
      %v1070 = vpop.f32.mrb[0].mxu0
      %v1071 = vadd.f32 %v1019, %v1070
      %v1072 = vpop.f32.mrb[0].mxu0
      %v1073 = vpop.f32.mrb[0].mxu0
      %v1074 = vadd.f32 %v1019, %v1073
      %v1075 = vpop.f32.mrb[0].mxu0
      %1076 = vdwg.mxu0
      %v1077 = vadd.f32 %v716, %v1071
      %v1078 = vadd.f32 %v717, %v1074
      %v1079 = vld [vmem:[%s680] sm:$0x1]
      %v1080 = vld [vmem:[%s683] sm:$0x1]
      %v1081 = vsel %vm742, %v1077, 0.0
      %1082 = vadd.xlane.f32.xlu0 %v1081
      %v1083 = vpop.xlane.xlu0 %1082
      %v1084 = vsel %vm742, %v1078, 0.0
      %1085 = vadd.xlane.f32.xlu0 %v1084
      %v1086 = vpop.xlane.xlu0 %1085
      %v1087 = vrcp.pop 32.0
      %v1088 = vmul.f32 %v1083, %v1087
      %v1089 = vmul.f32 %v1086, %v1087
      %v1090 = vsub.f32 %v1077, %v1088
      %v1091 = vsub.f32 %v1078, %v1089
      %v1092 = vmul.f32 %v1090, %v1090
      %v1093 = vmul.f32 %v1091, %v1091
      %v1094 = vsel %vm742, %v1092, 0.0
      %1095 = vadd.xlane.f32.xlu0 %v1094
      %v1096 = vpop.xlane.xlu0 %1095
      %v1097 = vsel %vm742, %v1093, 0.0
      %1098 = vadd.xlane.f32.xlu0 %v1097
      %v1099 = vpop.xlane.xlu0 %1098
      %v1100 = vmul.f32 %v1096, %v1087
      %v1101 = vmul.f32 %v1099, %v1087
      %v1102 = vadd.f32 %v1100, 1e-05
      %v1103 = vadd.f32 %v1101, 1e-05
      %v1104 = vrsqrt.pop %v1102
      %v1105 = vrsqrt.pop %v1103
      %v1106 = vmul.f32 %v1090, %v1104
      %v1107 = vmul.f32 %v1091, %v1105
      %v1109 = vlaneseq
      %v1110 = vshrl.u32 %v1109, 7
      %v1111 = vsub.s32 0, %v1110
      %v1112 = vrot.slane %v1079, %v1111
      %v1114 = vmul.f32 %v1106, %v1112
      %v1115 = vmul.f32 %v1107, %v1112
      %v1117 = vlaneseq
      %v1118 = vshrl.u32 %v1117, 7
      %v1119 = vsub.s32 0, %v1118
      %v1120 = vrot.slane %v1080, %v1119
      %v1122 = vadd.f32 %v1114, %v1120
      %v1123 = vadd.f32 %v1115, %v1120
      %v1124 = vpack.c.bf16 %v1123, %v1122
      %v1125 = vld [vmem:[%s688] sm:$0xf]
      %v1126 = vld [vmem:[%s688 + $0x4] sm:$0xf]
      %v1127 = vld [vmem:[%s688 + $0x8] sm:$0xf]
      %v1128 = vld [vmem:[%s688 + $0xc] sm:$0xf]
      %v1129 = vld [vmem:[%s691] sm:$0x1]
      %v1131 = vlaneseq
      %v1132 = vshrl.u32 %v1131, 7
      %v1133 = vsub.s32 0, %v1132
      %v1134 = vrot.slane %v1129, %v1133
      %v1140 = vunpack.c.l.b16 %v1125
      %v1141 = vunpack.c.l.b16 %v1126
      %v1142 = vunpack.c.l.b16 %v1127
      %v1143 = vunpack.c.l.b16 %v1128
      %v1144 = vpack.c.b16 %v1141, %v1140
      %v1145 = vpack.c.b16 %v1143, %v1142
      %v1149 = vsel %vm742, %v1124, 0
      %1151 = vmatprep.subr.bf16.mxu0 0
      %1152 = vmatpush1.bf16.msra.mxu0 %v1144
      %1153 = vmatprep.subr.bf16.mxu0 0
      %1154 = vmatpush1.bf16.msra.mxu0 %v1145
      %1155 = vmatprep.subr.bf16.mxu0 0
      %1156 = vmatpush1.bf16.msra.mxu0 0
      %1157 = vmatprep.subr.bf16.mxu0 0
      %1158 = vmatpush1.bf16.msra.mxu0 0
      %1159 = vmatprep.subr.bf16.mxu0 0
      %1160 = vmatpush1.bf16.msra.mxu0 0
      %1161 = vmatprep.subr.bf16.mxu0 0
      %1162 = vmatpush1.bf16.msra.mxu0 0
      %1163 = vmatprep.subr.bf16.mxu0 0
      %1164 = vmatpush1.bf16.msra.mxu0 0
      %1165 = vmatprep.subr.bf16.mxu0 0
      %1166 = vmatpush1.bf16.msra.mxu0 0
      %1167 = vmatprep.subr.bf16.mxu0 0
      %1168 = vmatpush1.bf16.msra.mxu0 0
      %1169 = vmatprep.subr.bf16.mxu0 0
      %1170 = vmatpush1.bf16.msra.mxu0 0
      %1171 = vmatprep.subr.bf16.mxu0 0
      %1172 = vmatpush1.bf16.msra.mxu0 0
      %1173 = vmatprep.subr.bf16.mxu0 0
      %1174 = vmatpush1.bf16.msra.mxu0 0
      %1175 = vmatprep.subr.bf16.mxu0 0
      %1176 = vmatpush1.bf16.msra.mxu0 0
      %1177 = vmatprep.subr.bf16.mxu0 0
      %1178 = vmatpush1.bf16.msra.mxu0 0
      %1179 = vmatprep.subr.bf16.mxu0 0
      %1180 = vmatpush1.bf16.msra.mxu0 0
      %1181 = vmatprep.subr.bf16.mxu0 0
      %1182 = vmatpush1.bf16.msra.mxu0 0
      %1183 = vmatprep.mubr.bf16.mxu0 0
      %1184 = vmatmul.mubr.bf16.gmra.mrb[0].mxu0 %v1149
      %v1185 = vpop.f32.mrb[0].mxu0
      %v1186 = vadd.f32 %v1134, %v1185
      %v1187 = vpop.f32.mrb[0].mxu0
      %v1188 = vpop.f32.mrb[0].mxu0
      %v1189 = vadd.f32 %v1134, %v1188
      %v1190 = vpop.f32.mrb[0].mxu0
      %1191 = vdwg.mxu0
      %v1192 = vmax.f32 %v1186, 0.0
      %v1193 = vmax.f32 %v1189, 0.0
      %v1194 = vpack.c.bf16 %v1193, %v1192
      %v1195 = vld [vmem:[%s696] sm:$0xf]
      %v1196 = vld [vmem:[%s696 + $0x4] sm:$0xf]
      %v1197 = vld [vmem:[%s696 + $0x8] sm:$0xf]
      %v1198 = vld [vmem:[%s696 + $0xc] sm:$0xf]
      %v1199 = vld [vmem:[%s696 + $0x10] sm:$0xf]
      %v1200 = vld [vmem:[%s696 + $0x14] sm:$0xf]
      %v1201 = vld [vmem:[%s696 + $0x18] sm:$0xf]
      %v1202 = vld [vmem:[%s696 + $0x1c] sm:$0xf]
      %v1203 = vld [vmem:[%s699] sm:$0x1]
      %v1205 = vlaneseq
      %v1206 = vshrl.u32 %v1205, 7
      %v1207 = vsub.s32 0, %v1206
      %v1208 = vrot.slane %v1203, %v1207
      %v1218 = vunpack.c.l.b16 %v1195
      %v1219 = vunpack.c.l.b16 %v1196
      %v1220 = vunpack.c.l.b16 %v1197
      %v1221 = vunpack.c.l.b16 %v1198
      %v1222 = vunpack.c.l.b16 %v1199
      %v1223 = vunpack.c.l.b16 %v1200
      %v1224 = vunpack.c.l.b16 %v1201
      %v1225 = vunpack.c.l.b16 %v1202
      %v1226 = vpack.c.b16 %v1219, %v1218
      %v1227 = vpack.c.b16 %v1221, %v1220
      %v1228 = vpack.c.b16 %v1223, %v1222
      %v1229 = vpack.c.b16 %v1225, %v1224
      %vm1234 = vcmask 523264
      %v1236 = vsel %vm1234, %v1194, 0
      %1238 = vmatprep.subr.bf16.mxu0 0
      %1239 = vmatpush1.bf16.msra.mxu0 %v1226
      %1240 = vmatprep.subr.bf16.mxu0 0
      %1241 = vmatpush1.bf16.msra.mxu0 %v1227
      %1242 = vmatprep.subr.bf16.mxu0 0
      %1243 = vmatpush1.bf16.msra.mxu0 %v1228
      %1244 = vmatprep.subr.bf16.mxu0 0
      %1245 = vmatpush1.bf16.msra.mxu0 %v1229
      %1246 = vmatprep.subr.bf16.mxu0 0
      %1247 = vmatpush1.bf16.msra.mxu0 0
      %1248 = vmatprep.subr.bf16.mxu0 0
      %1249 = vmatpush1.bf16.msra.mxu0 0
      %1250 = vmatprep.subr.bf16.mxu0 0
      %1251 = vmatpush1.bf16.msra.mxu0 0
      %1252 = vmatprep.subr.bf16.mxu0 0
      %1253 = vmatpush1.bf16.msra.mxu0 0
      %1254 = vmatprep.subr.bf16.mxu0 0
      %1255 = vmatpush1.bf16.msra.mxu0 0
      %1256 = vmatprep.subr.bf16.mxu0 0
      %1257 = vmatpush1.bf16.msra.mxu0 0
      %1258 = vmatprep.subr.bf16.mxu0 0
      %1259 = vmatpush1.bf16.msra.mxu0 0
      %1260 = vmatprep.subr.bf16.mxu0 0
      %1261 = vmatpush1.bf16.msra.mxu0 0
      %1262 = vmatprep.subr.bf16.mxu0 0
      %1263 = vmatpush1.bf16.msra.mxu0 0
      %1264 = vmatprep.subr.bf16.mxu0 0
      %1265 = vmatpush1.bf16.msra.mxu0 0
      %1266 = vmatprep.subr.bf16.mxu0 0
      %1267 = vmatpush1.bf16.msra.mxu0 0
      %1268 = vmatprep.subr.bf16.mxu0 0
      %1269 = vmatpush1.bf16.msra.mxu0 0
      %1270 = vmatprep.mubr.bf16.mxu0 0
      %1271 = vmatmul.mubr.bf16.gmra.mrb[0].mxu0 %v1236
      %v1272 = vpop.f32.mrb[0].mxu0
      %v1273 = vadd.f32 %v1208, %v1272
      %v1274 = vpop.f32.mrb[0].mxu0
      %v1275 = vpop.f32.mrb[0].mxu0
      %v1276 = vadd.f32 %v1208, %v1275
      %v1277 = vpop.f32.mrb[0].mxu0
      %1278 = vdwg.mxu0
      %v1279 = vadd.f32 %v1122, %v1273
      %v1280 = vadd.f32 %v1123, %v1276
      %v1281 = vld [vmem:[%s702] sm:$0x1]
      %v1282 = vld [vmem:[%s705] sm:$0x1]
      %v1283 = vsel %vm742, %v1279, 0.0
      %1284 = vadd.xlane.f32.xlu0 %v1283
      %v1285 = vpop.xlane.xlu0 %1284
      %v1286 = vsel %vm742, %v1280, 0.0
      %1287 = vadd.xlane.f32.xlu0 %v1286
      %v1288 = vpop.xlane.xlu0 %1287
      %v1289 = vmul.f32 %v1285, %v1087
      %v1290 = vmul.f32 %v1288, %v1087
      %v1291 = vsub.f32 %v1279, %v1289
      %v1292 = vsub.f32 %v1280, %v1290
      %v1293 = vmul.f32 %v1291, %v1291
      %v1294 = vmul.f32 %v1292, %v1292
      %v1295 = vsel %vm742, %v1293, 0.0
      %1296 = vadd.xlane.f32.xlu0 %v1295
      %v1297 = vpop.xlane.xlu0 %1296
      %v1298 = vsel %vm742, %v1294, 0.0
      %1299 = vadd.xlane.f32.xlu0 %v1298
      %v1300 = vpop.xlane.xlu0 %1299
      %v1301 = vmul.f32 %v1297, %v1087
      %v1302 = vmul.f32 %v1300, %v1087
      %v1303 = vadd.f32 %v1301, 1e-05
      %v1304 = vadd.f32 %v1302, 1e-05
      %v1305 = vrsqrt.pop %v1303
      %v1306 = vrsqrt.pop %v1304
      %v1307 = vmul.f32 %v1291, %v1305
      %v1308 = vmul.f32 %v1292, %v1306
      %v1310 = vlaneseq
      %v1311 = vshrl.u32 %v1310, 7
      %v1312 = vsub.s32 0, %v1311
      %v1313 = vrot.slane %v1281, %v1312
      %v1315 = vmul.f32 %v1307, %v1313
      %v1316 = vmul.f32 %v1308, %v1313
      %v1318 = vlaneseq
      %v1319 = vshrl.u32 %v1318, 7
      %v1320 = vsub.s32 0, %v1319
      %v1321 = vrot.slane %v1282, %v1320
      %v1323 = vadd.f32 %v1315, %v1321
      %v1324 = vadd.f32 %v1316, %v1321
      %1325 = vst.msk [vmem:[#allocation2] sm:$0xff] %vm742, %v1323
      %1326 = vst.msk [vmem:[#allocation2 + $0x8] sm:$0xff] %vm742, %v1324
      %p1327 = scmp.eq.s32.totalorder %s28, 1
      // Predicated region
      $region93: #{encoder_forward.1} parent=87 // pred_check
        %p1328 = pneg %p1327
      $region94: #{encoder_forward.1} parent=87 // pred_check_branch
        %1330 = sbr.rel (%p1328) target = $region96
      $region95: #{encoder_forward.1} parent=87 // pred_region
        %v1331 = vld [vmem:[%s13] sm:$0x1]
        %v1332 = vld [vmem:[%s14] sm:$0x1]
        %v1333 = vsel %vm742, %v1323, 0.0
        %1334 = vadd.xlane.f32.xlu0 %v1333
        %v1335 = vpop.xlane.xlu0 %1334
        %v1336 = vsel %vm742, %v1324, 0.0
        %1337 = vadd.xlane.f32.xlu0 %v1336
        %v1338 = vpop.xlane.xlu0 %1337
        %v1339 = vmul.f32 %v1335, %v1087
        %v1340 = vmul.f32 %v1338, %v1087
        %v1341 = vsub.f32 %v1323, %v1339
        %v1342 = vsub.f32 %v1324, %v1340
        %v1343 = vmul.f32 %v1341, %v1341
        %v1344 = vmul.f32 %v1342, %v1342
        %v1345 = vsel %vm742, %v1343, 0.0
        %1346 = vadd.xlane.f32.xlu0 %v1345
        %v1347 = vpop.xlane.xlu0 %1346
        %v1348 = vsel %vm742, %v1344, 0.0
        %1349 = vadd.xlane.f32.xlu0 %v1348
        %v1350 = vpop.xlane.xlu0 %1349
        %v1351 = vmul.f32 %v1347, %v1087
        %v1352 = vmul.f32 %v1350, %v1087
        %v1353 = vadd.f32 %v1351, 1e-05
        %v1354 = vadd.f32 %v1352, 1e-05
        %v1355 = vrsqrt.pop %v1353
        %v1356 = vrsqrt.pop %v1354
        %v1357 = vmul.f32 %v1341, %v1355
        %v1358 = vmul.f32 %v1342, %v1356
        %v1360 = vlaneseq
        %v1361 = vshrl.u32 %v1360, 7
        %v1362 = vsub.s32 0, %v1361
        %v1363 = vrot.slane %v1331, %v1362
        %v1365 = vmul.f32 %v1357, %v1363
        %v1366 = vmul.f32 %v1358, %v1363
        %v1368 = vlaneseq
        %v1369 = vshrl.u32 %v1368, 7
        %v1370 = vsub.s32 0, %v1369
        %v1371 = vrot.slane %v1332, %v1370
        %v1373 = vadd.f32 %v1365, %v1371
        %v1374 = vadd.f32 %v1366, %v1371
        %v1375 = vpack.c.bf16 %v1374, %v1373
        %v1376 = vld [vmem:[%s15] sm:$0xf]
        %v1377 = vld [vmem:[%s15 + $0x4] sm:$0xf]
        %v1378 = vld [vmem:[%s15 + $0x8] sm:$0xf]
        %v1379 = vld [vmem:[%s15 + $0xc] sm:$0xf]
        %v1380 = vld [vmem:[%s16] sm:$0x1]
        %v1382 = vlaneseq
        %v1383 = vshrl.u32 %v1382, 7
        %v1384 = vsub.s32 0, %v1383
        %v1385 = vrot.slane %v1380, %v1384
        %v1391 = vunpack.c.l.b16 %v1376
        %v1392 = vunpack.c.l.b16 %v1377
        %v1393 = vunpack.c.l.b16 %v1378
        %v1394 = vunpack.c.l.b16 %v1379
        %v1395 = vpack.c.b16 %v1392, %v1391
        %v1396 = vpack.c.b16 %v1394, %v1393
        %v1400 = vsel %vm742, %v1375, 0
        %1402 = vmatprep.subr.bf16.mxu0 0
        %1403 = vmatpush1.bf16.msra.mxu0 %v1395
        %1404 = vmatprep.subr.bf16.mxu0 0
        %1405 = vmatpush1.bf16.msra.mxu0 %v1396
        %1406 = vmatprep.subr.bf16.mxu0 0
        %1407 = vmatpush1.bf16.msra.mxu0 0
        %1408 = vmatprep.subr.bf16.mxu0 0
        %1409 = vmatpush1.bf16.msra.mxu0 0
        %1410 = vmatprep.subr.bf16.mxu0 0
        %1411 = vmatpush1.bf16.msra.mxu0 0
        %1412 = vmatprep.subr.bf16.mxu0 0
        %1413 = vmatpush1.bf16.msra.mxu0 0
        %1414 = vmatprep.subr.bf16.mxu0 0
        %1415 = vmatpush1.bf16.msra.mxu0 0
        %1416 = vmatprep.subr.bf16.mxu0 0
        %1417 = vmatpush1.bf16.msra.mxu0 0
        %1418 = vmatprep.subr.bf16.mxu0 0
        %1419 = vmatpush1.bf16.msra.mxu0 0
        %1420 = vmatprep.subr.bf16.mxu0 0
        %1421 = vmatpush1.bf16.msra.mxu0 0
        %1422 = vmatprep.subr.bf16.mxu0 0
        %1423 = vmatpush1.bf16.msra.mxu0 0
        %1424 = vmatprep.subr.bf16.mxu0 0
        %1425 = vmatpush1.bf16.msra.mxu0 0
        %1426 = vmatprep.subr.bf16.mxu0 0
        %1427 = vmatpush1.bf16.msra.mxu0 0
        %1428 = vmatprep.subr.bf16.mxu0 0
        %1429 = vmatpush1.bf16.msra.mxu0 0
        %1430 = vmatprep.subr.bf16.mxu0 0
        %1431 = vmatpush1.bf16.msra.mxu0 0
        %1432 = vmatprep.subr.bf16.mxu0 0
        %1433 = vmatpush1.bf16.msra.mxu0 0
        %1434 = vmatprep.mubr.bf16.mxu0 0
        %1435 = vmatmul.mubr.bf16.gmra.mrb[0].mxu0 %v1400
        %v1436 = vpop.f32.mrb[0].mxu0
        %v1437 = vadd.f32 %v1385, %v1436
        %v1438 = vpop.f32.mrb[0].mxu0
        %v1439 = vpop.f32.mrb[0].mxu0
        %v1440 = vadd.f32 %v1385, %v1439
        %v1441 = vpop.f32.mrb[0].mxu0
        %1442 = vdwg.mxu0
        %vm1443 = vcmask 130048
        %1444 = vst.msk [vmem:[%s17] sm:$0xff] %vm1443, %v1437
        %1445 = vst.msk [vmem:[%s17 + $0x8] sm:$0xff] %vm1443, %v1440
      $region96: #{encoder_forward.1} parent=87 // pred_fallthru
        _
      // Predicated region
      $region97: #{encoder_forward.1} parent=87 // pred_check
        %p1446 = pneg %p458
      $region98: #{encoder_forward.1} parent=87 // pred_check_branch
        %1448 = sbr.rel (%p1446) target = $region100
      $region99: #{encoder_forward.1} parent=87 // pred_region
        _
      $region100: #{encoder_forward.1} parent=87 // pred_fallthru
        _
      // Predicated region
      $region101: #{encoder_forward.1} parent=87 // pred_check
        %p1449 = pneg %p458
      $region102: #{encoder_forward.1} parent=87 // pred_check_branch
        %1451 = sbr.rel (%p1449) target = $region104
      $region103: #{encoder_forward.1} parent=87 // pred_region
        _
      $region104: #{encoder_forward.1} parent=87 // pred_fallthru
        _
    $region88: #{encoder_forward.1} parent=5 // pred_fallthru
      _
    %p1452 = scmp.le.s32.totalorder 2, %s23
    // Predicated region
    $region105: #{encoder_forward.1} parent=5 // pred_check
      %p1453 = pneg %p1452
    $region106: #{encoder_forward.1} parent=5 // pred_check_branch
      %1455 = sbr.rel (%p1453) target = $region108
    $region107: #{encoder_forward.1} parent=5 // pred_region
      %s1456 = ssub.s32 %s23, 2
    $region108: #{encoder_forward.1} parent=5 // pred_fallthru
      _
  $region6: #{encoder_forward.1} parent=0 // loop_footer
    %s27 = sadd.s32 1, %s23
  $region7: #{encoder_forward.1} parent=0 // loop_footer_branch
    %22 = sbr.rel target = $region3
  $region8: #{encoder_forward.1} parent=0 // loop_exit
    _

</llo_original>
